<compile_context>
chip_gen: v5e
topology: v5e:2x2
jax: 0.10.0
libtpu: 0.0.40
codegen_flags: <defaults>
</compile_context>

<pallas_src>
import functools

import jax
import jax.numpy as jnp
from jax import lax
from jax.experimental import pallas as pl
from jax.experimental.pallas import tpu as pltpu


def _round_up(x: int, m: int) -> int:
    return ((x + m - 1) // m) * m


def _choose_tm(T: int, cap: int = 512) -> int:
    """Token tile: 8-sublane aligned, >= 2 tiles when possible (megacore),
    sized so padding waste stays below one tile, capped at `cap`."""
    if T <= 8:
        return 8
    n_t = max(2, -(-T // cap))
    return _round_up(-(-T // n_t), 8)


def _choose_tf(F: int, H: int, w_bytes: int, budget: int = 32 * 2**20) -> int:
    """F-slab width: full F when the double-buffered gate/up/down weight slabs
    fit `budget`, else the largest multiple-of-128 divisor of F that does."""
    if F < 128 or 6 * H * F * w_bytes <= budget:
        return F
    cands = [d for d in range(128, F, 128) if F % d == 0]
    for d in sorted(cands, reverse=True):
        if 6 * H * d * w_bytes <= budget:
            return d
    return cands[0] if cands else F


# --------------------------------------------------------------------------
# Fused kernel: router (once per token tile) + per-expert, per-F-slab MLP
# grid = (token_tiles, num_experts, F_slabs); experts/F are reduction axes.
# --------------------------------------------------------------------------
def _moe_kernel(x_ref, wg_ref, wgate_ref, wup_ref, wdown_ref, o_ref,
                dw_ref, acc_ref, *, num_experts, top_k, activation):
    e = pl.program_id(1)
    f = pl.program_id(2)

    # ---- fused router + accumulator init: once per token tile -------------
    @pl.when((e == 0) & (f == 0))
    def _router():
        logits = jnp.dot(x_ref[...], wg_ref[...],
                         preferred_element_type=jnp.float32)       # (tm, E)
        m = jnp.max(logits, axis=-1, keepdims=True)
        p = jnp.exp(logits - m)
        probs = p / jnp.sum(p, axis=-1, keepdims=True)             # f32 softmax

        # iterative top-k: repeatedly take the current max (lowest index on ties)
        col = lax.broadcasted_iota(jnp.int32, probs.shape, 1)
        remaining = probs
        dense = jnp.zeros_like(probs)
        for _ in range(top_k):                    # static unroll, top_k small
            mx = jnp.max(remaining, axis=-1, keepdims=True)
            is_max = remaining >= mx
            idx = jnp.min(jnp.where(is_max, col, num_experts),
                          axis=-1, keepdims=True)
            sel = col == idx
            dense = jnp.where(sel, probs, dense)
            remaining = jnp.where(sel, -1.0, remaining)   # probs >= 0
        dense = dense / jnp.sum(dense, axis=-1, keepdims=True)     # renormalise
        dw_ref[...] = dense
        acc_ref[...] = jnp.zeros_like(acc_ref)

    # ---- expert MLP on one F-slab ------------------------------------------
    x = x_ref[...]                                                  # (tm, H)
    gate = jnp.dot(x, wgate_ref[0], preferred_element_type=jnp.float32)  # (tm, tf)
    up = jnp.dot(x, wup_ref[0], preferred_element_type=jnp.float32)      # (tm, tf)
    if activation == "gelu":
        # TODO(synk): torch F.gelu defaults to exact erf; tanh-approx used here.
        act = jax.nn.gelu(gate, approximate=True)
    else:  # relu
        act = jnp.maximum(gate, 0.0)
    h = (up * act).astype(x.dtype)                                  # (tm, tf)
    down = jnp.dot(h, wdown_ref[0], preferred_element_type=jnp.float32)  # (tm, H)

    # this expert's routing weight column (no dynamic lane indexing)
    col = lax.broadcasted_iota(jnp.int32, dw_ref.shape, 1)
    w_e = jnp.sum(jnp.where(col == e, dw_ref[...], 0.0),
                  axis=-1, keepdims=True)                           # (tm, 1)

    # TODO(synk): skip (tile, expert) pairs with no routed tokens (needs a
    # scalar-prefetched per-tile expert mask or grouped dispatch).
    acc_ref[...] += down * w_e

    @pl.when((e == pl.num_programs(1) - 1) & (f == pl.num_programs(2) - 1))
    def _finish():
        o_ref[...] = acc_ref[...].astype(o_ref.dtype)


# --------------------------------------------------------------------------
# Wrapper
# --------------------------------------------------------------------------
def moe_block(x, wg_router, w_gate, w_up, w_down, *, top_k,
              activation="gelu", tf=None):
    """Pallas implementation of MoeBlock.forward (inference path).

    Args:
      x:         (B, S, H) hidden states.
      wg_router: (H, E)    gate.weight.T
      w_gate:    (E, H, F) gate half of gate_up_proj.weight, transposed.
      w_up:      (E, H, F) up   half of gate_up_proj.weight, transposed.
      w_down:    (E, F, H) down_proj.weight, transposed.
      tf:        optional F-slab width override (must divide F).
    """
    B, S, H = x.shape
    E, H_w, F = w_gate.shape
    assert H_w == H and w_up.shape == (E, H, F) and w_down.shape == (E, F, H)
    assert top_k <= E, "Each token cannot be assigned to more than num_local_experts"
    assert activation in ("gelu", "relu")

    T = B * S
    xt = x.reshape(T, H)

    tm = _choose_tm(T)
    T_pad = _round_up(T, tm)
    if T_pad != T:
        xt = jnp.pad(xt, ((0, T_pad - T), (0, 0)))
    n_t = T_pad // tm

    w_bytes = jnp.dtype(w_gate.dtype).itemsize
    if tf is None:
        tf = _choose_tf(F, H, w_bytes)
    tf = min(tf, F)
    assert F % tf == 0, "F-slab width must divide the FFN dimension"
    n_f = F // tf

    # explicit VMEM budget: double-buffered inputs/output + f32 scratch
    x_bytes = jnp.dtype(x.dtype).itemsize
    e_pad = _round_up(E, 128)
    est = (2 * tm * H * x_bytes                                   # x tile
           + 2 * H * e_pad * jnp.dtype(wg_router.dtype).itemsize  # router W
           + 2 * 3 * H * tf * w_bytes                             # gate/up/down
           + 2 * tm * H * x_bytes                                 # output tile
           + tm * e_pad * 4 + tm * H * 4)                         # dw + acc
    vmem_limit = int(min(64 * 2**20, max(32 * 2**20, int(est * 1.5))))

    kernel = functools.partial(_moe_kernel, num_experts=E, top_k=top_k,
                               activation=activation)
    out = pl.pallas_call(
        kernel,
        out_shape=jax.ShapeDtypeStruct((T_pad, H), x.dtype),
        grid_spec=pltpu.PrefetchScalarGridSpec(
            num_scalar_prefetch=0,
            grid=(n_t, E, n_f),
            in_specs=[
                pl.BlockSpec((tm, H), lambda t, e, f: (t, 0)),        # tokens
                pl.BlockSpec((H, E), lambda t, e, f: (0, 0)),         # router W
                pl.BlockSpec((1, H, tf), lambda t, e, f: (e, 0, f)),  # gate W
                pl.BlockSpec((1, H, tf), lambda t, e, f: (e, 0, f)),  # up   W
                pl.BlockSpec((1, tf, H), lambda t, e, f: (e, f, 0)),  # down W
            ],
            out_specs=pl.BlockSpec((tm, H), lambda t, e, f: (t, 0)),
            scratch_shapes=[
                pltpu.VMEM((tm, E), jnp.float32),   # dense routing weights
                pltpu.VMEM((tm, H), jnp.float32),   # f32 accumulator
            ],
        ),
        compiler_params=pltpu.CompilerParams(
            dimension_semantics=("parallel", "arbitrary", "arbitrary"),
            vmem_limit_bytes=vmem_limit),
    )(xt, wg_router, w_gate, w_up, w_down)

    return out[:T].reshape(B, S, H)


# --------------------------------------------------------------------------
# Pure-JAX reference (mirrors the PyTorch forward) for correctness check
# --------------------------------------------------------------------------
def _moe_reference(x, wg_router, w_gate, w_up, w_down, top_k, activation):
    B, S, H = x.shape
    E = w_gate.shape[0]
    xt = x.reshape(-1, H)
    logits = xt.astype(jnp.float32) @ wg_router.astype(jnp.float32)
    probs = jax.nn.softmax(logits, axis=-1)
    topw, topi = lax.top_k(probs, top_k)
    topw = topw / jnp.sum(topw, axis=-1, keepdims=True)
    dense = jnp.zeros_like(probs)
    rows = jnp.arange(xt.shape[0])[:, None]
    dense = dense.at[rows, topi].set(topw)
    if activation == "gelu":
        act = lambda g: jax.nn.gelu(g, approximate=True)
    else:
        act = lambda g: jnp.maximum(g, 0.0)
    out = jnp.zeros((xt.shape[0], H), jnp.float32)
    for e in range(E):
        gate = xt @ w_gate[e]
        up = xt @ w_up[e]
        h = up * act(gate)
        out = out + (h @ w_down[e]) * dense[:, e:e + 1]
    return out.reshape(B, S, H).astype(x.dtype)


def _run_case(key, B, S, H, F, E, top_k, activation, tf=None, tol=1e-2):
    k1, k2, k3, k4, k5 = jax.random.split(key, 5)
    x = jax.random.normal(k1, (B, S, H), dtype=jnp.float32)
    wg_router = jax.random.normal(k2, (H, E), dtype=jnp.float32) / jnp.sqrt(H * 1.0)
    w_gate = jax.random.normal(k3, (E, H, F), dtype=jnp.float32) / jnp.sqrt(H * 1.0)
    w_up = jax.random.normal(k4, (E, H, F), dtype=jnp.float32) / jnp.sqrt(H * 1.0)
    w_down = jax.random.normal(k5, (E, F, H), dtype=jnp.float32) / jnp.sqrt(F * 1.0)

    y = moe_block(x, wg_router, w_gate, w_up, w_down,
                  top_k=top_k, activation=activation, tf=tf)
    y = jax.block_until_ready(y)
    y_ref = _moe_reference(x, wg_router, w_gate, w_up, w_down, top_k, activation)

    assert y.shape == x.shape, f"shape mismatch: {y.shape} vs {x.shape}"
    assert y.dtype == x.dtype, f"dtype mismatch: {y.dtype} vs {x.dtype}"
    max_err = float(jnp.max(jnp.abs(y - y_ref)))
    assert max_err < tol, f"MoE output mismatch, max abs err = {max_err}"


if __name__ == "__main__":
    # Keep the XLA reference matmuls at full f32 so the tolerance check is tight.
    jax.config.update("jax_default_matmul_precision", "highest")
    key = jax.random.PRNGKey(0)
    k_a, k_b = jax.random.split(key)

    # Small config consistent with the module (gelu, single F slab).
    _run_case(k_a, B=2, S=8, H=32, F=64, E=4, top_k=2, activation="gelu")

    # Slightly larger config exercising multiple token tiles, experts and
    # F-slabs (tf=128 -> n_f=2), relu activation.
    _run_case(k_b, B=2, S=64, H=128, F=256, E=8, top_k=2,
              activation="relu", tf=128)

    print("KERNEL_OK")
</pallas_src>

<mosaic_0001>
module attributes {stable_mosaic.version = 11 : i64} {
  func.func @_moe_kernel(%arg0: i32, %arg1: i32, %arg2: i32, %arg3: memref<8x32xf32, #tpu.memory_space<vmem>>, %arg4: memref<32x4xf32, #tpu.memory_space<vmem>>, %arg5: memref<1x32x64xf32, #tpu.memory_space<vmem>>, %arg6: memref<1x32x64xf32, #tpu.memory_space<vmem>>, %arg7: memref<1x64x32xf32, #tpu.memory_space<vmem>>, %arg8: memref<8x32xf32, #tpu.memory_space<vmem>>, %arg9: memref<8x4xf32, #tpu.memory_space<vmem>>, %arg10: memref<8x32xf32, #tpu.memory_space<vmem>>) attributes {dimension_semantics = [#tpu.dimension_semantics<parallel>, #tpu.dimension_semantics<arbitrary>, #tpu.dimension_semantics<arbitrary>], iteration_bounds = array<i64: 2, 4, 1>, scalar_prefetch = 0 : i64, scratch_operands = 2 : i64, tpu.core_type = #tpu.core_type<tc>, window_params = [{transform_indices = @transform_0, window_bounds = array<i64: 8, 32>}, {pipeline_mode = #tpu.pipeline_mode<synchronous>, transform_indices = @transform_1, window_bounds = array<i64: 32, 4>}, {transform_indices = @transform_2, window_bounds = array<i64: 1, 32, 64>}, {transform_indices = @transform_3, window_bounds = array<i64: 1, 32, 64>}, {transform_indices = @transform_4, window_bounds = array<i64: 1, 64, 32>}, {transform_indices = @transform_5, window_bounds = array<i64: 8, 32>}]} {
    %c0_i32 = arith.constant 0 : i32
    %0 = arith.cmpi eq, %arg1, %c0_i32 : i32
    %c0_i32_0 = arith.constant 0 : i32
    %1 = arith.cmpi eq, %arg2, %c0_i32_0 : i32
    %2 = arith.andi %0, %1 : i1
    %3 = arith.extui %2 : i1 to i32
    %c0_i32_1 = arith.constant 0 : i32
    %4 = arith.cmpi ne, %3, %c0_i32_1 : i32
    scf.if %4 {
      %c0_28 = arith.constant 0 : index
      %c0_29 = arith.constant 0 : index
      %47 = vector.load %arg3[%c0_28, %c0_29] : memref<8x32xf32, #tpu.memory_space<vmem>>, vector<8x32xf32>
      %c0_30 = arith.constant 0 : index
      %c0_31 = arith.constant 0 : index
      %48 = vector.load %arg4[%c0_30, %c0_31] : memref<32x4xf32, #tpu.memory_space<vmem>>, vector<32x4xf32>
      %cst_32 = arith.constant dense<0.000000e+00> : vector<8x4xf32>
      %49 = tpu.matmul %47, %48, %cst_32 {dimension_numbers = #tpu.dot_dimension_numbers<[1], [0], [0], [1], [0, 0, 1, 1], [], []>, precision = #tpu.contract_precision<fp32>} : vector<8x32xf32>, vector<32x4xf32>, vector<8x4xf32> -> vector<8x4xf32>
      %cst_33 = arith.constant dense<0xFF800000> : vector<8xf32>
      %50 = vector.multi_reduction <maximumf>, %49, %cst_33 [1] : vector<8x4xf32> to vector<8xf32>
      %51 = vector.shape_cast %50 : vector<8xf32> to vector<8x1xf32>
      %52 = vector.broadcast %51 : vector<8x1xf32> to vector<8x4xf32>
      %53 = arith.subf %49, %52 : vector<8x4xf32>
      %54 = math.exp %53 : vector<8x4xf32>
      %cst_34 = arith.constant dense<0.000000e+00> : vector<8xf32>
      %55 = vector.multi_reduction <add>, %54, %cst_34 [1] : vector<8x4xf32> to vector<8xf32>
      %56 = vector.shape_cast %55 : vector<8xf32> to vector<8x1xf32>
      %57 = vector.broadcast %56 : vector<8x1xf32> to vector<8x4xf32>
      %58 = arith.divf %54, %57 : vector<8x4xf32>
      %59 = tpu.iota {dimensions = array<i32: 1>} : vector<8x4xi32>
      %cst_35 = arith.constant 0.000000e+00 : f32
      %60 = vector.broadcast %cst_35 : f32 to vector<8x4xf32>
      %cst_36 = arith.constant dense<0xFF800000> : vector<8xf32>
      %61 = vector.multi_reduction <maximumf>, %58, %cst_36 [1] : vector<8x4xf32> to vector<8xf32>
      %62 = vector.shape_cast %61 : vector<8xf32> to vector<8x1xf32>
      %63 = vector.broadcast %62 : vector<8x1xf32> to vector<8x4xf32>
      %64 = arith.cmpf oge, %58, %63 : vector<8x4xf32>
      %c4_i32 = arith.constant 4 : i32
      %65 = vector.broadcast %c4_i32 : i32 to vector<8x4xi32>
      %66 = arith.select %64, %59, %65 : vector<8x4xi1>, vector<8x4xi32>
      %cst_37 = arith.constant dense<2147483647> : vector<8xi32>
      %67 = vector.multi_reduction <minsi>, %66, %cst_37 [1] : vector<8x4xi32> to vector<8xi32>
      %68 = vector.shape_cast %67 : vector<8xi32> to vector<8x1xi32>
      %69 = vector.broadcast %68 : vector<8x1xi32> to vector<8x4xi32>
      %70 = arith.cmpi eq, %59, %69 : vector<8x4xi32>
      %71 = arith.select %70, %58, %60 : vector<8x4xi1>, vector<8x4xf32>
      %cst_38 = arith.constant -1.000000e+00 : f32
      %72 = vector.broadcast %cst_38 : f32 to vector<8x4xf32>
      %73 = arith.select %70, %72, %58 : vector<8x4xi1>, vector<8x4xf32>
      %cst_39 = arith.constant dense<0xFF800000> : vector<8xf32>
      %74 = vector.multi_reduction <maximumf>, %73, %cst_39 [1] : vector<8x4xf32> to vector<8xf32>
      %75 = vector.shape_cast %74 : vector<8xf32> to vector<8x1xf32>
      %76 = vector.broadcast %75 : vector<8x1xf32> to vector<8x4xf32>
      %77 = arith.cmpf oge, %73, %76 : vector<8x4xf32>
      %c4_i32_40 = arith.constant 4 : i32
      %78 = vector.broadcast %c4_i32_40 : i32 to vector<8x4xi32>
      %79 = arith.select %77, %59, %78 : vector<8x4xi1>, vector<8x4xi32>
      %cst_41 = arith.constant dense<2147483647> : vector<8xi32>
      %80 = vector.multi_reduction <minsi>, %79, %cst_41 [1] : vector<8x4xi32> to vector<8xi32>
      %81 = vector.shape_cast %80 : vector<8xi32> to vector<8x1xi32>
      %82 = vector.broadcast %81 : vector<8x1xi32> to vector<8x4xi32>
      %83 = arith.cmpi eq, %59, %82 : vector<8x4xi32>
      %84 = arith.select %83, %58, %71 : vector<8x4xi1>, vector<8x4xf32>
      %cst_42 = arith.constant dense<0.000000e+00> : vector<8xf32>
      %85 = vector.multi_reduction <add>, %84, %cst_42 [1] : vector<8x4xf32> to vector<8xf32>
      %86 = vector.shape_cast %85 : vector<8xf32> to vector<8x1xf32>
      %87 = vector.broadcast %86 : vector<8x1xf32> to vector<8x4xf32>
      %88 = arith.divf %84, %87 : vector<8x4xf32>
      %c0_43 = arith.constant 0 : index
      %c0_44 = arith.constant 0 : index
      %89 = vector.load %arg9[%c0_43, %c0_44] : memref<8x4xf32, #tpu.memory_space<vmem>>, vector<8x4xf32>
      tpu.vector_store %arg9[%c0_43, %c0_44], %88 {strides = array<i32>} : memref<8x4xf32, #tpu.memory_space<vmem>>, vector<8x4xf32>,
      %cst_45 = arith.constant 0.000000e+00 : f32
      %90 = vector.broadcast %cst_45 : f32 to vector<8x32xf32>
      %c0_46 = arith.constant 0 : index
      %c0_47 = arith.constant 0 : index
      %91 = vector.load %arg10[%c0_46, %c0_47] : memref<8x32xf32, #tpu.memory_space<vmem>>, vector<8x32xf32>
      tpu.vector_store %arg10[%c0_46, %c0_47], %90 {strides = array<i32>} : memref<8x32xf32, #tpu.memory_space<vmem>>, vector<8x32xf32>,
    } else {
    }
    %c0 = arith.constant 0 : index
    %c0_2 = arith.constant 0 : index
    %5 = vector.load %arg3[%c0, %c0_2] : memref<8x32xf32, #tpu.memory_space<vmem>>, vector<8x32xf32>
    %c0_3 = arith.constant 0 : index
    %c0_4 = arith.constant 0 : index
    %c0_5 = arith.constant 0 : index
    %6 = vector.load %arg5[%c0_3, %c0_4, %c0_5] : memref<1x32x64xf32, #tpu.memory_space<vmem>>, vector<1x32x64xf32>
    %7 = vector.shape_cast %6 : vector<1x32x64xf32> to vector<32x64xf32>
    %cst = arith.constant dense<0.000000e+00> : vector<8x64xf32>
    %8 = tpu.matmul %5, %7, %cst {dimension_numbers = #tpu.dot_dimension_numbers<[1], [0], [0], [1], [0, 0, 1, 1], [], []>, precision = #tpu.contract_precision<fp32>} : vector<8x32xf32>, vector<32x64xf32>, vector<8x64xf32> -> vector<8x64xf32>
    %c0_6 = arith.constant 0 : index
    %c0_7 = arith.constant 0 : index
    %c0_8 = arith.constant 0 : index
    %9 = vector.load %arg6[%c0_6, %c0_7, %c0_8] : memref<1x32x64xf32, #tpu.memory_space<vmem>>, vector<1x32x64xf32>
    %10 = vector.shape_cast %9 : vector<1x32x64xf32> to vector<32x64xf32>
    %cst_9 = arith.constant dense<0.000000e+00> : vector<8x64xf32>
    %11 = tpu.matmul %5, %10, %cst_9 {dimension_numbers = #tpu.dot_dimension_numbers<[1], [0], [0], [1], [0, 0, 1, 1], [], []>, precision = #tpu.contract_precision<fp32>} : vector<8x32xf32>, vector<32x64xf32>, vector<8x64xf32> -> vector<8x64xf32>
    %12 = arith.mulf %8, %8 : vector<8x64xf32>
    %13 = arith.mulf %8, %12 : vector<8x64xf32>
    %cst_10 = arith.constant 4.471500e-02 : f32
    %14 = vector.broadcast %cst_10 : f32 to vector<8x64xf32>
    %15 = arith.mulf %14, %13 : vector<8x64xf32>
    %16 = arith.addf %8, %15 : vector<8x64xf32>
    %cst_11 = arith.constant 0.797884583 : f32
    %17 = vector.broadcast %cst_11 : f32 to vector<8x64xf32>
    %18 = arith.mulf %17, %16 : vector<8x64xf32>
    %19 = math.tanh %18 : vector<8x64xf32>
    %cst_12 = arith.constant 1.000000e+00 : f32
    %20 = vector.broadcast %cst_12 : f32 to vector<8x64xf32>
    %21 = arith.addf %20, %19 : vector<8x64xf32>
    %cst_13 = arith.constant 5.000000e-01 : f32
    %22 = vector.broadcast %cst_13 : f32 to vector<8x64xf32>
    %23 = arith.mulf %22, %21 : vector<8x64xf32>
    %24 = arith.mulf %8, %23 : vector<8x64xf32>
    %25 = arith.mulf %11, %24 : vector<8x64xf32>
    %c0_14 = arith.constant 0 : index
    %c0_15 = arith.constant 0 : index
    %c0_16 = arith.constant 0 : index
    %26 = vector.load %arg7[%c0_14, %c0_15, %c0_16] : memref<1x64x32xf32, #tpu.memory_space<vmem>>, vector<1x64x32xf32>
    %27 = vector.shape_cast %26 : vector<1x64x32xf32> to vector<64x32xf32>
    %cst_17 = arith.constant dense<0.000000e+00> : vector<8x32xf32>
    %28 = tpu.matmul %25, %27, %cst_17 {dimension_numbers = #tpu.dot_dimension_numbers<[1], [0], [0], [1], [0, 0, 1, 1], [], []>, precision = #tpu.contract_precision<fp32>} : vector<8x64xf32>, vector<64x32xf32>, vector<8x32xf32> -> vector<8x32xf32>
    %29 = tpu.iota {dimensions = array<i32: 1>} : vector<8x4xi32>
    %30 = vector.broadcast %arg1 : i32 to vector<8x4xi32>
    %31 = arith.cmpi eq, %29, %30 : vector<8x4xi32>
    %c0_18 = arith.constant 0 : index
    %c0_19 = arith.constant 0 : index
    %32 = vector.load %arg9[%c0_18, %c0_19] : memref<8x4xf32, #tpu.memory_space<vmem>>, vector<8x4xf32>
    %cst_20 = arith.constant 0.000000e+00 : f32
    %33 = vector.broadcast %cst_20 : f32 to vector<8x4xf32>
    %34 = arith.select %31, %32, %33 : vector<8x4xi1>, vector<8x4xf32>
    %cst_21 = arith.constant dense<0.000000e+00> : vector<8xf32>
    %35 = vector.multi_reduction <add>, %34, %cst_21 [1] : vector<8x4xf32> to vector<8xf32>
    %36 = vector.shape_cast %35 : vector<8xf32> to vector<8x1xf32>
    %c0_22 = arith.constant 0 : index
    %c0_23 = arith.constant 0 : index
    %37 = vector.load %arg10[%c0_22, %c0_23] : memref<8x32xf32, #tpu.memory_space<vmem>>, vector<8x32xf32>
    %38 = vector.broadcast %36 : vector<8x1xf32> to vector<8x32xf32>
    %39 = arith.mulf %28, %38 : vector<8x32xf32>
    %40 = arith.addf %37, %39 : vector<8x32xf32>
    %c0_24 = arith.constant 0 : index
    %c0_25 = arith.constant 0 : index
    %41 = vector.load %arg10[%c0_24, %c0_25] : memref<8x32xf32, #tpu.memory_space<vmem>>, vector<8x32xf32>
    tpu.vector_store %arg10[%c0_24, %c0_25], %40 {strides = array<i32>} : memref<8x32xf32, #tpu.memory_space<vmem>>, vector<8x32xf32>,
    %c3_i32 = arith.constant 3 : i32
    %42 = arith.cmpi eq, %arg1, %c3_i32 : i32
    %c0_i32_26 = arith.constant 0 : i32
    %43 = arith.cmpi eq, %arg2, %c0_i32_26 : i32
    %44 = arith.andi %42, %43 : i1
    %45 = arith.extui %44 : i1 to i32
    %c0_i32_27 = arith.constant 0 : i32
    %46 = arith.cmpi ne, %45, %c0_i32_27 : i32
    scf.if %46 {
      %c0_28 = arith.constant 0 : index
      %c0_29 = arith.constant 0 : index
      %47 = vector.load %arg10[%c0_28, %c0_29] : memref<8x32xf32, #tpu.memory_space<vmem>>, vector<8x32xf32>
      %c0_30 = arith.constant 0 : index
      %c0_31 = arith.constant 0 : index
      %48 = vector.load %arg8[%c0_30, %c0_31] : memref<8x32xf32, #tpu.memory_space<vmem>>, vector<8x32xf32>
      tpu.vector_store %arg8[%c0_30, %c0_31], %47 {strides = array<i32>} : memref<8x32xf32, #tpu.memory_space<vmem>>, vector<8x32xf32>,
    } else {
    }
    return
  }
  func.func @transform_0(%arg0: i32, %arg1: i32, %arg2: i32) -> (i32, i32) {
    %c0_i32 = arith.constant 0 : i32
    %c0_i32_0 = arith.constant 0 : i32
    return %arg0, %c0_i32 : i32, i32
  }
  func.func @transform_1(%arg0: i32, %arg1: i32, %arg2: i32) -> (i32, i32) {
    %c0_i32 = arith.constant 0 : i32
    %c0_i32_0 = arith.constant 0 : i32
    %c0_i32_1 = arith.constant 0 : i32
    return %c0_i32, %c0_i32_0 : i32, i32
  }
  func.func @transform_2(%arg0: i32, %arg1: i32, %arg2: i32) -> (i32, i32, i32) {
    %c0_i32 = arith.constant 0 : i32
    %c0_i32_0 = arith.constant 0 : i32
    return %arg1, %c0_i32, %arg2 : i32, i32, i32
  }
  func.func @transform_3(%arg0: i32, %arg1: i32, %arg2: i32) -> (i32, i32, i32) {
    %c0_i32 = arith.constant 0 : i32
    %c0_i32_0 = arith.constant 0 : i32
    return %arg1, %c0_i32, %arg2 : i32, i32, i32
  }
  func.func @transform_4(%arg0: i32, %arg1: i32, %arg2: i32) -> (i32, i32, i32) {
    %c0_i32 = arith.constant 0 : i32
    %c0_i32_0 = arith.constant 0 : i32
    return %arg1, %arg2, %c0_i32 : i32, i32, i32
  }
  func.func @transform_5(%arg0: i32, %arg1: i32, %arg2: i32) -> (i32, i32) {
    %c0_i32 = arith.constant 0 : i32
    %c0_i32_0 = arith.constant 0 : i32
    return %arg0, %c0_i32 : i32, i32
  }
}

</mosaic_0001>

<llo_original>
// kernel: tpu_custom_call.1
$region0: #{tpu_custom_call.1}
  #allocation0 [shape = 'u32[]', space=smem, size = 0x4, offset = 0x4, fixed_abs, tag = 'smem constant byte address 0x4 - core index']
  #allocation1 [shape = 'u32[72,128]{1,0:T(1,128)}', space=vmem, size = 0x9000, scoped, tag = 'internal scratch']
  #allocation2 [shape = 'f32[8,4]{1,0:T(8,128)}', space=vmem, size = 0x1000, scoped, tag = 'scratch operand']
  #allocation3 [shape = 'f32[8,32]{1,0:T(8,128)}', space=vmem, size = 0x1000, scoped, tag = 'scratch operand']
  %s0 = inlined_call_operand.vmem [shape: f32[16,32], index: 0, kind: input, shape index: {}]
  %s1 = inlined_call_operand.vmem [shape: f32[32,4], index: 1, kind: input, shape index: {}]
  %s2 = inlined_call_operand.vmem [shape: f32[4,32,64], index: 2, kind: input, shape index: {}]
  %s3 = inlined_call_operand.vmem [shape: f32[4,32,64], index: 3, kind: input, shape index: {}]
  %s4 = inlined_call_operand.vmem [shape: f32[4,64,32], index: 4, kind: input, shape index: {}]
  %s5 = inlined_call_operand.hbm [shape: f32[16,32], index: 5, kind: output, shape index: {}]
  %s6 = sld [smem:[#allocation0]]
  $region61: #{tpu_custom_call.1} parent=0
    _
  %s8 = ssub.s32 1, %s6
  %s9 = scalar_select 0, %s8, %s6
  $region1: #{tpu_custom_call.1} parent=0
    #allocation4 [shape = 'u8[8192]{0}', space=vmem, size = 0x2000, scoped, tag = 'output window, operand 0']
    #allocation5 [shape = 's32[2]{0}', space=sflag, size = 0x8, scoped, tag = 'scoped memory for tpu_custom_call.1']
    %10 = vsyncpa [#allocation5], 0
    %s11 = scalar_lea.sflag [#allocation5], 1
    %12 = vsyncpa %s11, 0
    loop: start=0, step=1, limit=10
    $region2: #{tpu_custom_call.1} parent=1 // loop_pre_header
      _
    $region3: #{tpu_custom_call.1} parent=1 // loop_header
      %s14 = sphi 0, %s18
      %p15 = scmp.ge.s32.totalorder %s14, 10
      %s21 = sphi 0, %s40
      %s22 = sphi 0, %s36
      %s23 = sphi 0, %s32
      %s24 = sphi 0, %s21
      %s25 = sphi 0, %s22
      %s26 = sphi 0, %s23
      %s27 = sphi 0, %s24
      %s28 = sphi 0, %s25
      %s29 = sphi 0, %s26
      %s43 = sphi 0, %s45
      %s46 = sphi 0, %s43
      %s47 = sphi 0, %s46
      %s63 = sphi 0, %s47
      %s67 = sphi 0, %s67
      %s69 = sphi 0, %s67
      %s70 = sphi 0, %s69
      %s84 = sphi 0, %s70
      %s92 = sphi 0, %s94
      %s95 = sphi 0, %s92
      %s96 = sphi 0, %s95
      %s112 = sphi 0, %s96
      %s120 = sphi 0, %s122
      %s123 = sphi 0, %s120
      %s124 = sphi 0, %s123
      %s140 = sphi 0, %s124
      %s148 = sphi 0, %s150
      %s151 = sphi 0, %s148
      %s152 = sphi 0, %s151
      %s168 = sphi 0, %s152
      %s174 = sphi 0, %s176
      %s177 = sphi 0, %s174
      %s178 = sphi 0, %s177
      %s194 = sphi 0, %s178
    $region4: #{tpu_custom_call.1} parent=1 // loop_header_branch
      %17 = sbr.rel (%p15) target = $region8
    $region5: #{tpu_custom_call.1} parent=1 // loop_body
      %s19 = ssub.s32 %s14, 1
      %s20 = ssub.s32 %s14, 2
      %s30 = sadd.s32 1, %s23
      %p31 = scmp.ge.s32.totalorder %s30, 1
      %s32 = scalar_select %p31, 0, %s30
      %s33 = sadd.s32 1, %s22
      %s34 = scalar_select %p31, %s33, %s22
      %p35 = scmp.ge.s32.totalorder %s34, 4
      %s36 = scalar_select %p35, 0, %s34
      %s37 = sadd.s32 1, %s21
      %s38 = scalar_select %p35, %s37, %s21
      %p39 = scmp.ge.s32.totalorder %s38, 2
      %s40 = scalar_select %p39, 0, %s38
      %s41 = ssub.s32 %s21, %s40
      %p42 = scmp.eq.s32.totalorder %s41, 0
      %s44 = sadd.s32 %s43, 1
      %s45 = scalar_select %p42, %s43, %s44
      %p48 = pneg %p42
      %p49 = scmp.eq.s32.totalorder %s14, 7
      %p50 = por %p48, %p49
      %p51 = scmp.ne.s32.totalorder %s43, %s46
      %p52 = scmp.eq.s32.totalorder %s14, 0
      %p53 = por %p51, %p52
      %p54 = scmp.ne.s32.totalorder %s43, %s46
      %p55 = scmp.eq.s32.totalorder %s19, 7
      %p56 = por %p54, %p55
      %p57 = scmp.ne.s32.totalorder %s46, %s47
      %p58 = scmp.eq.s32.totalorder %s19, 0
      %p59 = por %p57, %p58
      %p60 = scmp.ne.s32.totalorder %s46, %s47
      %p61 = scmp.eq.s32.totalorder %s20, 7
      %p62 = por %p60, %p61
      %p64 = scmp.ne.s32.totalorder %s47, %s63
      %p65 = scmp.eq.s32.totalorder %s20, 0
      %p66 = por %p64, %p65
      %s68 = sadd.s32 %s67, 1
      %p71 = scmp.eq.s32.totalorder %s14, 7
      %p72 = scmp.ne.s32.totalorder %s67, %s69
      %p73 = scmp.eq.s32.totalorder %s14, 0
      %p74 = por %p72, %p73
      %p75 = scmp.ne.s32.totalorder %s67, %s69
      %p76 = scmp.eq.s32.totalorder %s19, 7
      %p77 = por %p75, %p76
      %p78 = scmp.ne.s32.totalorder %s69, %s70
      %p79 = scmp.eq.s32.totalorder %s19, 0
      %p80 = por %p78, %p79
      %p81 = scmp.ne.s32.totalorder %s69, %s70
      %p82 = scmp.eq.s32.totalorder %s20, 7
      %p83 = por %p81, %p82
      %p85 = scmp.ne.s32.totalorder %s70, %s84
      %p86 = scmp.eq.s32.totalorder %s20, 0
      %p87 = por %p85, %p86
      %s88 = ssub.s32 %s22, %s36
      %s89 = ssub.s32 %s23, %s32
      %s90 = sor.u32 %s88, %s89
      %p91 = scmp.eq.s32.totalorder %s90, 0
      %s93 = sadd.s32 %s92, 1
      %s94 = scalar_select %p91, %s92, %s93
      %p97 = pneg %p91
      %p98 = scmp.eq.s32.totalorder %s14, 7
      %p99 = por %p97, %p98
      %p100 = scmp.ne.s32.totalorder %s92, %s95
      %p101 = scmp.eq.s32.totalorder %s14, 0
      %p102 = por %p100, %p101
      %p103 = scmp.ne.s32.totalorder %s92, %s95
      %p104 = scmp.eq.s32.totalorder %s19, 7
      %p105 = por %p103, %p104
      %p106 = scmp.ne.s32.totalorder %s95, %s96
      %p107 = scmp.eq.s32.totalorder %s19, 0
      %p108 = por %p106, %p107
      %p109 = scmp.ne.s32.totalorder %s95, %s96
      %p110 = scmp.eq.s32.totalorder %s20, 7
      %p111 = por %p109, %p110
      %p113 = scmp.ne.s32.totalorder %s96, %s112
      %p114 = scmp.eq.s32.totalorder %s20, 0
      %p115 = por %p113, %p114
      %s116 = ssub.s32 %s22, %s36
      %s117 = ssub.s32 %s23, %s32
      %s118 = sor.u32 %s116, %s117
      %p119 = scmp.eq.s32.totalorder %s118, 0
      %s121 = sadd.s32 %s120, 1
      %s122 = scalar_select %p119, %s120, %s121
      %p125 = pneg %p119
      %p126 = scmp.eq.s32.totalorder %s14, 7
      %p127 = por %p125, %p126
      %p128 = scmp.ne.s32.totalorder %s120, %s123
      %p129 = scmp.eq.s32.totalorder %s14, 0
      %p130 = por %p128, %p129
      %p131 = scmp.ne.s32.totalorder %s120, %s123
      %p132 = scmp.eq.s32.totalorder %s19, 7
      %p133 = por %p131, %p132
      %p134 = scmp.ne.s32.totalorder %s123, %s124
      %p135 = scmp.eq.s32.totalorder %s19, 0
      %p136 = por %p134, %p135
      %p137 = scmp.ne.s32.totalorder %s123, %s124
      %p138 = scmp.eq.s32.totalorder %s20, 7
      %p139 = por %p137, %p138
      %p141 = scmp.ne.s32.totalorder %s124, %s140
      %p142 = scmp.eq.s32.totalorder %s20, 0
      %p143 = por %p141, %p142
      %s144 = ssub.s32 %s22, %s36
      %s145 = ssub.s32 %s23, %s32
      %s146 = sor.u32 %s144, %s145
      %p147 = scmp.eq.s32.totalorder %s146, 0
      %s149 = sadd.s32 %s148, 1
      %s150 = scalar_select %p147, %s148, %s149
      %p153 = pneg %p147
      %p154 = scmp.eq.s32.totalorder %s14, 7
      %p155 = por %p153, %p154
      %p156 = scmp.ne.s32.totalorder %s148, %s151
      %p157 = scmp.eq.s32.totalorder %s14, 0
      %p158 = por %p156, %p157
      %p159 = scmp.ne.s32.totalorder %s148, %s151
      %p160 = scmp.eq.s32.totalorder %s19, 7
      %p161 = por %p159, %p160
      %p162 = scmp.ne.s32.totalorder %s151, %s152
      %p163 = scmp.eq.s32.totalorder %s19, 0
      %p164 = por %p162, %p163
      %p165 = scmp.ne.s32.totalorder %s151, %s152
      %p166 = scmp.eq.s32.totalorder %s20, 7
      %p167 = por %p165, %p166
      %p169 = scmp.ne.s32.totalorder %s152, %s168
      %p170 = scmp.eq.s32.totalorder %s20, 0
      %p171 = por %p169, %p170
      %s172 = ssub.s32 %s21, %s40
      %p173 = scmp.eq.s32.totalorder %s172, 0
      %s175 = sadd.s32 %s174, 1
      %s176 = scalar_select %p173, %s174, %s175
      %p179 = pneg %p173
      %p180 = scmp.eq.s32.totalorder %s14, 7
      %p181 = por %p179, %p180
      %p182 = scmp.ne.s32.totalorder %s174, %s177
      %p183 = scmp.eq.s32.totalorder %s14, 0
      %p184 = por %p182, %p183
      %p185 = scmp.ne.s32.totalorder %s174, %s177
      %p186 = scmp.eq.s32.totalorder %s19, 7
      %p187 = por %p185, %p186
      %p188 = scmp.ne.s32.totalorder %s177, %s178
      %p189 = scmp.eq.s32.totalorder %s19, 0
      %p190 = por %p188, %p189
      %p191 = scmp.ne.s32.totalorder %s177, %s178
      %p192 = scmp.eq.s32.totalorder %s20, 7
      %p193 = por %p191, %p192
      %p195 = scmp.ne.s32.totalorder %s178, %s194
      %p196 = scmp.eq.s32.totalorder %s20, 0
      %p197 = por %p195, %p196
      %p198 = scmp.le.s32.totalorder 1, %s14
      %p199 = scmp.lt.s32.totalorder %s14, 9
      %p200 = pnand %p198, %p199
      %p201 = pneg %p200
      // Predicated region
      $region9: #{tpu_custom_call.1} parent=5 // pred_check
        _
      $region10: #{tpu_custom_call.1} parent=5 // pred_check_branch
        %203 = sbr.rel (%p200) target = $region12
      $region11: #{tpu_custom_call.1} parent=5 // pred_region
        %s204 = ssub.s32 %s14, 1
        // Predicated region
        $region13: #{tpu_custom_call.1} parent=11 // pred_check
          %p205 = pneg %p80
        $region14: #{tpu_custom_call.1} parent=11 // pred_check_branch
          %207 = sbr.rel (%p205) target = $region16
        $region15: #{tpu_custom_call.1} parent=11 // pred_region
          _
        $region16: #{tpu_custom_call.1} parent=11 // pred_fallthru
          _
      $region12: #{tpu_custom_call.1} parent=5 // pred_fallthru
        _
      %p208 = scmp.lt.s32.totalorder %s14, 8
      // Predicated region
      $region17: #{tpu_custom_call.1} parent=5 // pred_check
        %p209 = pneg %p208
      $region18: #{tpu_custom_call.1} parent=5 // pred_check_branch
        %211 = sbr.rel (%p209) target = $region20
      $region19: #{tpu_custom_call.1} parent=5 // pred_region
        // Predicated region
        $region21: #{tpu_custom_call.1} parent=19 // pred_check
          %p212 = pneg %p53
        $region22: #{tpu_custom_call.1} parent=19 // pred_check_branch
          %214 = sbr.rel (%p212) target = $region24
        $region23: #{tpu_custom_call.1} parent=19 // pred_region
          %p215 = scmp.lt.s32.totalorder %s21, 1
          %s216 = scalar_select %p215, %s21, 1
          %s217 = smul.addr %s216, 8
          %s218 = scalar_lea.vmem %s0, %s217
        $region24: #{tpu_custom_call.1} parent=19 // pred_fallthru
          _
        // Predicated region
        $region25: #{tpu_custom_call.1} parent=19 // pred_check
          %p219 = pneg %p102
        $region26: #{tpu_custom_call.1} parent=19 // pred_check_branch
          %221 = sbr.rel (%p219) target = $region28
        $region27: #{tpu_custom_call.1} parent=19 // pred_region
          %p222 = scmp.lt.s32.totalorder %s22, 3
          %s223 = scalar_select %p222, %s22, 3
          %p224 = scmp.lt.s32.totalorder %s23, 0
          %s225 = scalar_select %p224, %s23, 0
          %s226 = smul.addr %s223, 4
          %s227 = sadd.s32 %s225, %s226
          %s228 = smul.addr %s227, 8
          %s229 = scalar_lea.vmem %s2, %s228
        $region28: #{tpu_custom_call.1} parent=19 // pred_fallthru
          _
        // Predicated region
        $region29: #{tpu_custom_call.1} parent=19 // pred_check
          %p230 = pneg %p130
        $region30: #{tpu_custom_call.1} parent=19 // pred_check_branch
          %232 = sbr.rel (%p230) target = $region32
        $region31: #{tpu_custom_call.1} parent=19 // pred_region
          %p233 = scmp.lt.s32.totalorder %s22, 3
          %s234 = scalar_select %p233, %s22, 3
          %p235 = scmp.lt.s32.totalorder %s23, 0
          %s236 = scalar_select %p235, %s23, 0
          %s237 = smul.addr %s234, 4
          %s238 = sadd.s32 %s236, %s237
          %s239 = smul.addr %s238, 8
          %s240 = scalar_lea.vmem %s3, %s239
        $region32: #{tpu_custom_call.1} parent=19 // pred_fallthru
          _
        // Predicated region
        $region33: #{tpu_custom_call.1} parent=19 // pred_check
          %p241 = pneg %p158
        $region34: #{tpu_custom_call.1} parent=19 // pred_check_branch
          %243 = sbr.rel (%p241) target = $region36
        $region35: #{tpu_custom_call.1} parent=19 // pred_region
          %s244 = smul.u32 8, %s23
          %p245 = scmp.lt.s32.totalorder %s22, 3
          %s246 = scalar_select %p245, %s22, 3
          %p247 = scmp.lt.s32.totalorder %s244, 7
          %s248 = scalar_select %p247, %s244, 7
          %s249 = smul.addr %s246, 8
          %s250 = sadd.s32 %s248, %s249
          %s251 = smul.addr %s250, 8
          %s252 = scalar_lea.vmem %s4, %s251
          %s253 = smul.u32 8, %s23
        $region36: #{tpu_custom_call.1} parent=19 // pred_fallthru
          _
      $region20: #{tpu_custom_call.1} parent=5 // pred_fallthru
        _
      %p254 = scmp.le.s32.totalorder 1, %s14
      %p255 = scmp.lt.s32.totalorder %s14, 9
      %p256 = pnand %p254, %p255
      %p257 = pneg %p256
      // Predicated region
      $region37: #{tpu_custom_call.1} parent=5 // pred_check
        _
      $region38: #{tpu_custom_call.1} parent=5 // pred_check_branch
        %259 = sbr.rel (%p256) target = $region40
      $region39: #{tpu_custom_call.1} parent=5 // pred_region
        %s260 = ssub.s32 %s14, 1
        %p261 = scmp.lt.s32.totalorder %s24, 1
        %s262 = scalar_select %p261, %s24, 1
        %s263 = smul.addr %s262, 8
        %s264 = scalar_lea.vmem %s0, %s263
        %p265 = pneg %p59
        %p266 = pneg %p56
        %p267 = pneg %p80
        %p268 = pneg %p77
        %p269 = scmp.lt.s32.totalorder %s25, 3
        %s270 = scalar_select %p269, %s25, 3
        %p271 = scmp.lt.s32.totalorder %s26, 0
        %s272 = scalar_select %p271, %s26, 0
        %s273 = smul.addr %s270, 4
        %s274 = sadd.s32 %s272, %s273
        %s275 = smul.addr %s274, 8
        %s276 = scalar_lea.vmem %s2, %s275
        %p277 = pneg %p108
        %p278 = pneg %p105
        %p279 = scmp.lt.s32.totalorder %s25, 3
        %s280 = scalar_select %p279, %s25, 3
        %p281 = scmp.lt.s32.totalorder %s26, 0
        %s282 = scalar_select %p281, %s26, 0
        %s283 = smul.addr %s280, 4
        %s284 = sadd.s32 %s282, %s283
        %s285 = smul.addr %s284, 8
        %s286 = scalar_lea.vmem %s3, %s285
        %p287 = pneg %p136
        %p288 = pneg %p133
        %s289 = smul.u32 8, %s26
        %p290 = scmp.lt.s32.totalorder %s25, 3
        %s291 = scalar_select %p290, %s25, 3
        %p292 = scmp.lt.s32.totalorder %s289, 7
        %s293 = scalar_select %p292, %s289, 7
        %s294 = smul.addr %s291, 8
        %s295 = sadd.s32 %s293, %s294
        %s296 = smul.addr %s295, 8
        %s297 = scalar_lea.vmem %s4, %s296
        %p298 = pneg %p164
        %p299 = pneg %p161
        %p300 = pneg %p190
        %p301 = pneg %p187
        %s302 = sand.u32 %s177, 1
        %s303 = scalar_lea.sflag [#allocation5], %s302
        %s304 = sand.u32 %s177, 1
        %s305 = smul.addr %s304, 8
        %s306 = scalar_lea.vmem [#allocation4], %s305
        %p307 = scmp.lt.s32.totalorder %s24, 1
        %s308 = scalar_select %p307, %s24, 1
        %s309 = smul.addr %s308, 8
        %s310 = scalar_lea.vmem %s0, %s309
        %p311 = scmp.lt.s32.totalorder %s25, 3
        %s312 = scalar_select %p311, %s25, 3
        %p313 = scmp.lt.s32.totalorder %s26, 0
        %s314 = scalar_select %p313, %s26, 0
        %s315 = smul.addr %s312, 4
        %s316 = sadd.s32 %s314, %s315
        %s317 = smul.addr %s316, 8
        %s318 = scalar_lea.vmem %s2, %s317
        %p319 = scmp.lt.s32.totalorder %s25, 3
        %s320 = scalar_select %p319, %s25, 3
        %p321 = scmp.lt.s32.totalorder %s26, 0
        %s322 = scalar_select %p321, %s26, 0
        %s323 = smul.addr %s320, 4
        %s324 = sadd.s32 %s322, %s323
        %s325 = smul.addr %s324, 8
        %s326 = scalar_lea.vmem %s3, %s325
        %s327 = smul.u32 8, %s26
        %p328 = scmp.lt.s32.totalorder %s25, 3
        %s329 = scalar_select %p328, %s25, 3
        %p330 = scmp.lt.s32.totalorder %s327, 7
        %s331 = scalar_select %p330, %s327, 7
        %s332 = smul.addr %s329, 8
        %s333 = sadd.s32 %s331, %s332
        %s334 = smul.addr %s333, 8
        %s335 = scalar_lea.vmem %s4, %s334
        %s336 = smul.u32 8, %s26
        %p337 = scmp.eq.s32.totalorder %s25, 0
        %p338 = scmp.eq.s32.totalorder %s26, 0
        %p339 = pnand %p337, %p338
        %p340 = pneg %p339
        // Predicated region
        $region41: #{tpu_custom_call.1} parent=39 // pred_check
          _
        $region42: #{tpu_custom_call.1} parent=39 // pred_check_branch
          %342 = sbr.rel (%p339) target = $region44
        $region43: #{tpu_custom_call.1} parent=39 // pred_region
          %v343 = vld [vmem:[%s310] sm:$0xff]
          %v344 = vld [vmem:[%s1] sm:$0xff]
          %v345 = vld [vmem:[%s1 + $0x8] sm:$0xff]
          %v346 = vld [vmem:[%s1 + $0x10] sm:$0xff]
          %v347 = vld [vmem:[%s1 + $0x18] sm:$0xff]
          %vm348 = vcmask 261120
          %v350 = vsel %vm348, %v343, 0
          %352 = vmatpush.msra.mxu0 0.0
          %353 = vmatpush.msra.mxu0 0.0
          %354 = vmatpush.msra.mxu0 0.0
          %355 = vmatpush.msra.mxu0 0.0
          %356 = vmatpush.msra.mxu0 0.0
          %357 = vmatpush.msra.mxu0 0.0
          %358 = vmatpush.msra.mxu0 0.0
          %359 = vmatpush.msra.mxu0 0.0
          %360 = vmatpush.msra.mxu0 0.0
          %361 = vmatpush.msra.mxu0 0.0
          %362 = vmatpush.msra.mxu0 0.0
          %363 = vmatpush.msra.mxu0 0.0
          %v364 = vand.u32 %v347, 4294901760
          %365 = vmatpush.msra.mxu0 %v364
          %v366 = vand.u32 %v346, 4294901760
          %367 = vmatpush.msra.mxu0 %v366
          %v368 = vand.u32 %v345, 4294901760
          %369 = vmatpush.msra.mxu0 %v368
          %v370 = vand.u32 %v344, 4294901760
          %371 = vmatpush.msra.mxu0 %v370
          %v372 = vand.u32 %v350, 4294901760
          %v373 = vsub.f32 %v350, %v372
          %v374 = vand.u32 %v373, 4294901760
          %v375 = vsub.f32 %v373, %v374
          %v376 = vand.u32 %v375, 4294901760
          %377 = vmatmul.f32.gmra.mxu0 %v376
          %v378 = vpop.f32.mrf.mxu0
          %v379 = vadd.f32 0.0, %v378
          %380 = vdwg.mxu0
          %381 = vmatpush.msra.mxu0 0.0
          %382 = vmatpush.msra.mxu0 0.0
          %383 = vmatpush.msra.mxu0 0.0
          %384 = vmatpush.msra.mxu0 0.0
          %385 = vmatpush.msra.mxu0 0.0
          %386 = vmatpush.msra.mxu0 0.0
          %387 = vmatpush.msra.mxu0 0.0
          %388 = vmatpush.msra.mxu0 0.0
          %389 = vmatpush.msra.mxu0 0.0
          %390 = vmatpush.msra.mxu0 0.0
          %391 = vmatpush.msra.mxu0 0.0
          %392 = vmatpush.msra.mxu0 0.0
          %v393 = vand.u32 %v347, 4294901760
          %v394 = vsub.f32 %v347, %v393
          %v395 = vand.u32 %v394, 4294901760
          %v396 = vsub.f32 %v394, %v395
          %v397 = vand.u32 %v396, 4294901760
          %398 = vmatpush.msra.mxu0 %v397
          %v399 = vand.u32 %v346, 4294901760
          %v400 = vsub.f32 %v346, %v399
          %v401 = vand.u32 %v400, 4294901760
          %v402 = vsub.f32 %v400, %v401
          %v403 = vand.u32 %v402, 4294901760
          %404 = vmatpush.msra.mxu0 %v403
          %v405 = vand.u32 %v345, 4294901760
          %v406 = vsub.f32 %v345, %v405
          %v407 = vand.u32 %v406, 4294901760
          %v408 = vsub.f32 %v406, %v407
          %v409 = vand.u32 %v408, 4294901760
          %410 = vmatpush.msra.mxu0 %v409
          %v411 = vand.u32 %v344, 4294901760
          %v412 = vsub.f32 %v344, %v411
          %v413 = vand.u32 %v412, 4294901760
          %v414 = vsub.f32 %v412, %v413
          %v415 = vand.u32 %v414, 4294901760
          %416 = vmatpush.msra.mxu0 %v415
          %v417 = vand.u32 %v350, 4294901760
          %418 = vmatmul.f32.gmra.mxu0 %v417
          %v419 = vpop.f32.mrf.mxu0
          %v420 = vadd.f32 %v379, %v419
          %421 = vdwg.mxu0
          %422 = vmatpush.msra.mxu0 0.0
          %423 = vmatpush.msra.mxu0 0.0
          %424 = vmatpush.msra.mxu0 0.0
          %425 = vmatpush.msra.mxu0 0.0
          %426 = vmatpush.msra.mxu0 0.0
          %427 = vmatpush.msra.mxu0 0.0
          %428 = vmatpush.msra.mxu0 0.0
          %429 = vmatpush.msra.mxu0 0.0
          %430 = vmatpush.msra.mxu0 0.0
          %431 = vmatpush.msra.mxu0 0.0
          %432 = vmatpush.msra.mxu0 0.0
          %433 = vmatpush.msra.mxu0 0.0
          %v434 = vand.u32 %v347, 4294901760
          %v435 = vsub.f32 %v347, %v434
          %436 = vmatpush.msra.mxu0 %v435
          %v437 = vand.u32 %v346, 4294901760
          %v438 = vsub.f32 %v346, %v437
          %439 = vmatpush.msra.mxu0 %v438
          %v440 = vand.u32 %v345, 4294901760
          %v441 = vsub.f32 %v345, %v440
          %442 = vmatpush.msra.mxu0 %v441
          %v443 = vand.u32 %v344, 4294901760
          %v444 = vsub.f32 %v344, %v443
          %445 = vmatpush.msra.mxu0 %v444
          %v446 = vand.u32 %v350, 4294901760
          %v447 = vsub.f32 %v350, %v446
          %448 = vmatmul.f32.gmra.mxu0 %v447
          %v449 = vpop.f32.mrf.mxu0
          %v450 = vadd.f32 %v420, %v449
          %451 = vdwg.mxu0
          %452 = vmatpush.msra.mxu0 0.0
          %453 = vmatpush.msra.mxu0 0.0
          %454 = vmatpush.msra.mxu0 0.0
          %455 = vmatpush.msra.mxu0 0.0
          %456 = vmatpush.msra.mxu0 0.0
          %457 = vmatpush.msra.mxu0 0.0
          %458 = vmatpush.msra.mxu0 0.0
          %459 = vmatpush.msra.mxu0 0.0
          %460 = vmatpush.msra.mxu0 0.0
          %461 = vmatpush.msra.mxu0 0.0
          %462 = vmatpush.msra.mxu0 0.0
          %463 = vmatpush.msra.mxu0 0.0
          %v464 = vand.u32 %v347, 4294901760
          %465 = vmatpush.msra.mxu0 %v464
          %v466 = vand.u32 %v346, 4294901760
          %467 = vmatpush.msra.mxu0 %v466
          %v468 = vand.u32 %v345, 4294901760
          %469 = vmatpush.msra.mxu0 %v468
          %v470 = vand.u32 %v344, 4294901760
          %471 = vmatpush.msra.mxu0 %v470
          %v472 = vand.u32 %v350, 4294901760
          %v473 = vsub.f32 %v350, %v472
          %v474 = vand.u32 %v473, 4294901760
          %475 = vmatmul.f32.gmra.mxu0 %v474
          %v476 = vpop.f32.mrf.mxu0
          %v477 = vadd.f32 %v450, %v476
          %478 = vdwg.mxu0
          %479 = vmatpush.msra.mxu0 0.0
          %480 = vmatpush.msra.mxu0 0.0
          %481 = vmatpush.msra.mxu0 0.0
          %482 = vmatpush.msra.mxu0 0.0
          %483 = vmatpush.msra.mxu0 0.0
          %484 = vmatpush.msra.mxu0 0.0
          %485 = vmatpush.msra.mxu0 0.0
          %486 = vmatpush.msra.mxu0 0.0
          %487 = vmatpush.msra.mxu0 0.0
          %488 = vmatpush.msra.mxu0 0.0
          %489 = vmatpush.msra.mxu0 0.0
          %490 = vmatpush.msra.mxu0 0.0
          %v491 = vand.u32 %v347, 4294901760
          %v492 = vsub.f32 %v347, %v491
          %v493 = vand.u32 %v492, 4294901760
          %494 = vmatpush.msra.mxu0 %v493
          %v495 = vand.u32 %v346, 4294901760
          %v496 = vsub.f32 %v346, %v495
          %v497 = vand.u32 %v496, 4294901760
          %498 = vmatpush.msra.mxu0 %v497
          %v499 = vand.u32 %v345, 4294901760
          %v500 = vsub.f32 %v345, %v499
          %v501 = vand.u32 %v500, 4294901760
          %502 = vmatpush.msra.mxu0 %v501
          %v503 = vand.u32 %v344, 4294901760
          %v504 = vsub.f32 %v344, %v503
          %v505 = vand.u32 %v504, 4294901760
          %506 = vmatpush.msra.mxu0 %v505
          %v507 = vand.u32 %v350, 4294901760
          %508 = vmatmul.f32.gmra.mxu0 %v507
          %v509 = vpop.f32.mrf.mxu0
          %v510 = vadd.f32 %v477, %v509
          %511 = vdwg.mxu0
          %512 = vmatpush.msra.mxu0 0.0
          %513 = vmatpush.msra.mxu0 0.0
          %514 = vmatpush.msra.mxu0 0.0
          %515 = vmatpush.msra.mxu0 0.0
          %516 = vmatpush.msra.mxu0 0.0
          %517 = vmatpush.msra.mxu0 0.0
          %518 = vmatpush.msra.mxu0 0.0
          %519 = vmatpush.msra.mxu0 0.0
          %520 = vmatpush.msra.mxu0 0.0
          %521 = vmatpush.msra.mxu0 0.0
          %522 = vmatpush.msra.mxu0 0.0
          %523 = vmatpush.msra.mxu0 0.0
          %v524 = vand.u32 %v347, 4294901760
          %525 = vmatpush.msra.mxu0 %v524
          %v526 = vand.u32 %v346, 4294901760
          %527 = vmatpush.msra.mxu0 %v526
          %v528 = vand.u32 %v345, 4294901760
          %529 = vmatpush.msra.mxu0 %v528
          %v530 = vand.u32 %v344, 4294901760
          %531 = vmatpush.msra.mxu0 %v530
          %v532 = vand.u32 %v350, 4294901760
          %533 = vmatmul.f32.gmra.mxu0 %v532
          %v534 = vpop.f32.mrf.mxu0
          %v535 = vadd.f32 %v510, %v534
          %536 = vdwg.mxu0
          %vm537 = vcmask 31744
          %v538 = vsel %vm537, %v535, -inf
          %539 = vmax.xlane.f32.xlu0 %v538
          %v540 = vpop.xlane.xlu0 %539
          %v541 = vsub.f32 %v535, %v540
          %v542 = vmul.f32 %v541, 1.442695
          %v543 = vpow.pop %v542
          %v544 = vsel %vm537, %v543, 0.0
          %545 = vadd.xlane.f32.xlu0 %v544
          %v546 = vpop.xlane.xlu0 %545
          %v547 = vrcp.pop %v546
          %v548 = vmul.f32 %v546, %v547
          %v549 = vsub.f32 1.0, %v548
          %v550 = vmul.f32 %v547, %v549
          %v551 = vadd.f32 %v547, %v550
          %vm552 = vweird.f32 %v546
          %vm553 = vweird.f32 %v547
          %vm554 = vmor %vm552, %vm553
          %v555 = vsel %vm554, %v547, %v551
          %v556 = vand.u32 2147483647, %v546
          %vm557 = vcmp.eq.f32.partialorder %v556, 8.507059e+37
          %v558 = vand.u32 %v546, 2147483648
          %v559 = vor.u32 1.1754944e-38, %v558
          %v560 = vsel %vm557, %v559, %v555
          %v561 = vmul.f32 %v543, %v560
          %v562 = vlaneseq
          %v563 = vand.u32 %v562, 127
          %v564 = vsel %vm537, %v561, -inf
          %565 = vmax.xlane.f32.xlu0 %v564
          %v566 = vpop.xlane.xlu0 %565
          %vm567 = vcmp.ge.f32.partialorder %v561, %v566
          %v568 = vsel %vm567, %v563, 4
          %v569 = vsel %vm537, %v568, 2147483647
          %v570 = vand.u32 %v569, 65535
          %v571 = vshra.s32 %v569, 16
          %v572 = vcvt.s32.f32 %v570
          %v573 = vcvt.s32.f32 %v571
          %574 = vmin.xlane.f32.xlu0 %v573
          %v575 = vpop.xlane.xlu0 %574
          %vm576 = vcmp.eq.f32.partialorder %v573, %v575
          %v577 = vsel %vm576, %v572, inf
          %578 = vmin.xlane.f32.xlu0 %v577
          %v579 = vpop.xlane.xlu0 %578
          %v580 = vcvt.f32.s32 %v579
          %v581 = vcvt.f32.s32 %v575
          %v582 = vshll.u32 %v581, 16
          %v583 = vadd.s32 %v582, %v580
          %vm584 = vcmp.eq.s32.totalorder %v563, %v583
          %v585 = vsel %vm584, %v561, 0.0
          %v586 = vsel %vm584, -1.0, %v561
          %v587 = vsel %vm537, %v586, -inf
          %588 = vmax.xlane.f32.xlu0 %v587
          %v589 = vpop.xlane.xlu0 %588
          %vm590 = vcmp.ge.f32.partialorder %v586, %v589
          %v591 = vsel %vm590, %v563, 4
          %v592 = vsel %vm537, %v591, 2147483647
          %v593 = vand.u32 %v592, 65535
          %v594 = vshra.s32 %v592, 16
          %v595 = vcvt.s32.f32 %v593
          %v596 = vcvt.s32.f32 %v594
          %597 = vmin.xlane.f32.xlu0 %v596
          %v598 = vpop.xlane.xlu0 %597
          %vm599 = vcmp.eq.f32.partialorder %v596, %v598
          %v600 = vsel %vm599, %v595, inf
          %601 = vmin.xlane.f32.xlu0 %v600
          %v602 = vpop.xlane.xlu0 %601
          %v603 = vcvt.f32.s32 %v602
          %v604 = vcvt.f32.s32 %v598
          %v605 = vshll.u32 %v604, 16
          %v606 = vadd.s32 %v605, %v603
          %vm607 = vcmp.eq.s32.totalorder %v563, %v606
          %v608 = vsel %vm607, %v561, %v585
          %v609 = vsel %vm537, %v608, 0.0
          %610 = vadd.xlane.f32.xlu0 %v609
          %v611 = vpop.xlane.xlu0 %610
          %v612 = vrcp.pop %v611
          %v613 = vmul.f32 %v611, %v612
          %v614 = vsub.f32 1.0, %v613
          %v615 = vmul.f32 %v612, %v614
          %v616 = vadd.f32 %v612, %v615
          %vm617 = vweird.f32 %v611
          %vm618 = vweird.f32 %v612
          %vm619 = vmor %vm617, %vm618
          %v620 = vsel %vm619, %v612, %v616
          %v621 = vand.u32 2147483647, %v611
          %vm622 = vcmp.eq.f32.partialorder %v621, 8.507059e+37
          %v623 = vand.u32 %v611, 2147483648
          %v624 = vor.u32 1.1754944e-38, %v623
          %v625 = vsel %vm622, %v624, %v620
          %v626 = vmul.f32 %v608, %v625
          %627 = vst.msk [vmem:[#allocation2] sm:$0xff] %vm537, %v626
          %628 = vst.msk [vmem:[#allocation3] sm:$0xff] %vm348, 0.0
        $region44: #{tpu_custom_call.1} parent=39 // pred_fallthru
          _
        %v629 = vld [vmem:[%s310] sm:$0xff]
        %v630 = vld [vmem:[%s318] sm:$0xff]
        %v631 = vld [vmem:[%s318 + $0x8] sm:$0xff]
        %v632 = vld [vmem:[%s318 + $0x10] sm:$0xff]
        %v633 = vld [vmem:[%s318 + $0x18] sm:$0xff]
        %vm634 = vcmask 261120
        %v636 = vsel %vm634, %v629, 0
        %638 = vmatpush.msra.mxu0 0.0
        %639 = vmatpush.msra.mxu0 0.0
        %640 = vmatpush.msra.mxu0 0.0
        %641 = vmatpush.msra.mxu0 0.0
        %642 = vmatpush.msra.mxu0 0.0
        %643 = vmatpush.msra.mxu0 0.0
        %644 = vmatpush.msra.mxu0 0.0
        %645 = vmatpush.msra.mxu0 0.0
        %646 = vmatpush.msra.mxu0 0.0
        %647 = vmatpush.msra.mxu0 0.0
        %648 = vmatpush.msra.mxu0 0.0
        %649 = vmatpush.msra.mxu0 0.0
        %v650 = vand.u32 %v633, 4294901760
        %651 = vmatpush.msra.mxu0 %v650
        %v652 = vand.u32 %v632, 4294901760
        %653 = vmatpush.msra.mxu0 %v652
        %v654 = vand.u32 %v631, 4294901760
        %655 = vmatpush.msra.mxu0 %v654
        %v656 = vand.u32 %v630, 4294901760
        %657 = vmatpush.msra.mxu0 %v656
        %v658 = vand.u32 %v636, 4294901760
        %v659 = vsub.f32 %v636, %v658
        %v660 = vand.u32 %v659, 4294901760
        %v661 = vsub.f32 %v659, %v660
        %v662 = vand.u32 %v661, 4294901760
        %663 = vmatmul.f32.gmra.mxu0 %v662
        %v664 = vpop.f32.mrf.mxu0
        %v665 = vadd.f32 0.0, %v664
        %666 = vdwg.mxu0
        %667 = vmatpush.msra.mxu0 0.0
        %668 = vmatpush.msra.mxu0 0.0
        %669 = vmatpush.msra.mxu0 0.0
        %670 = vmatpush.msra.mxu0 0.0
        %671 = vmatpush.msra.mxu0 0.0
        %672 = vmatpush.msra.mxu0 0.0
        %673 = vmatpush.msra.mxu0 0.0
        %674 = vmatpush.msra.mxu0 0.0
        %675 = vmatpush.msra.mxu0 0.0
        %676 = vmatpush.msra.mxu0 0.0
        %677 = vmatpush.msra.mxu0 0.0
        %678 = vmatpush.msra.mxu0 0.0
        %v679 = vand.u32 %v633, 4294901760
        %v680 = vsub.f32 %v633, %v679
        %v681 = vand.u32 %v680, 4294901760
        %v682 = vsub.f32 %v680, %v681
        %v683 = vand.u32 %v682, 4294901760
        %684 = vmatpush.msra.mxu0 %v683
        %v685 = vand.u32 %v632, 4294901760
        %v686 = vsub.f32 %v632, %v685
        %v687 = vand.u32 %v686, 4294901760
        %v688 = vsub.f32 %v686, %v687
        %v689 = vand.u32 %v688, 4294901760
        %690 = vmatpush.msra.mxu0 %v689
        %v691 = vand.u32 %v631, 4294901760
        %v692 = vsub.f32 %v631, %v691
        %v693 = vand.u32 %v692, 4294901760
        %v694 = vsub.f32 %v692, %v693
        %v695 = vand.u32 %v694, 4294901760
        %696 = vmatpush.msra.mxu0 %v695
        %v697 = vand.u32 %v630, 4294901760
        %v698 = vsub.f32 %v630, %v697
        %v699 = vand.u32 %v698, 4294901760
        %v700 = vsub.f32 %v698, %v699
        %v701 = vand.u32 %v700, 4294901760
        %702 = vmatpush.msra.mxu0 %v701
        %v703 = vand.u32 %v636, 4294901760
        %704 = vmatmul.f32.gmra.mxu0 %v703
        %v705 = vpop.f32.mrf.mxu0
        %v706 = vadd.f32 %v665, %v705
        %707 = vdwg.mxu0
        %708 = vmatpush.msra.mxu0 0.0
        %709 = vmatpush.msra.mxu0 0.0
        %710 = vmatpush.msra.mxu0 0.0
        %711 = vmatpush.msra.mxu0 0.0
        %712 = vmatpush.msra.mxu0 0.0
        %713 = vmatpush.msra.mxu0 0.0
        %714 = vmatpush.msra.mxu0 0.0
        %715 = vmatpush.msra.mxu0 0.0
        %716 = vmatpush.msra.mxu0 0.0
        %717 = vmatpush.msra.mxu0 0.0
        %718 = vmatpush.msra.mxu0 0.0
        %719 = vmatpush.msra.mxu0 0.0
        %v720 = vand.u32 %v633, 4294901760
        %v721 = vsub.f32 %v633, %v720
        %722 = vmatpush.msra.mxu0 %v721
        %v723 = vand.u32 %v632, 4294901760
        %v724 = vsub.f32 %v632, %v723
        %725 = vmatpush.msra.mxu0 %v724
        %v726 = vand.u32 %v631, 4294901760
        %v727 = vsub.f32 %v631, %v726
        %728 = vmatpush.msra.mxu0 %v727
        %v729 = vand.u32 %v630, 4294901760
        %v730 = vsub.f32 %v630, %v729
        %731 = vmatpush.msra.mxu0 %v730
        %v732 = vand.u32 %v636, 4294901760
        %v733 = vsub.f32 %v636, %v732
        %734 = vmatmul.f32.gmra.mxu0 %v733
        %v735 = vpop.f32.mrf.mxu0
        %v736 = vadd.f32 %v706, %v735
        %737 = vdwg.mxu0
        %738 = vmatpush.msra.mxu0 0.0
        %739 = vmatpush.msra.mxu0 0.0
        %740 = vmatpush.msra.mxu0 0.0
        %741 = vmatpush.msra.mxu0 0.0
        %742 = vmatpush.msra.mxu0 0.0
        %743 = vmatpush.msra.mxu0 0.0
        %744 = vmatpush.msra.mxu0 0.0
        %745 = vmatpush.msra.mxu0 0.0
        %746 = vmatpush.msra.mxu0 0.0
        %747 = vmatpush.msra.mxu0 0.0
        %748 = vmatpush.msra.mxu0 0.0
        %749 = vmatpush.msra.mxu0 0.0
        %v750 = vand.u32 %v633, 4294901760
        %751 = vmatpush.msra.mxu0 %v750
        %v752 = vand.u32 %v632, 4294901760
        %753 = vmatpush.msra.mxu0 %v752
        %v754 = vand.u32 %v631, 4294901760
        %755 = vmatpush.msra.mxu0 %v754
        %v756 = vand.u32 %v630, 4294901760
        %757 = vmatpush.msra.mxu0 %v756
        %v758 = vand.u32 %v636, 4294901760
        %v759 = vsub.f32 %v636, %v758
        %v760 = vand.u32 %v759, 4294901760
        %761 = vmatmul.f32.gmra.mxu0 %v760
        %v762 = vpop.f32.mrf.mxu0
        %v763 = vadd.f32 %v736, %v762
        %764 = vdwg.mxu0
        %765 = vmatpush.msra.mxu0 0.0
        %766 = vmatpush.msra.mxu0 0.0
        %767 = vmatpush.msra.mxu0 0.0
        %768 = vmatpush.msra.mxu0 0.0
        %769 = vmatpush.msra.mxu0 0.0
        %770 = vmatpush.msra.mxu0 0.0
        %771 = vmatpush.msra.mxu0 0.0
        %772 = vmatpush.msra.mxu0 0.0
        %773 = vmatpush.msra.mxu0 0.0
        %774 = vmatpush.msra.mxu0 0.0
        %775 = vmatpush.msra.mxu0 0.0
        %776 = vmatpush.msra.mxu0 0.0
        %v777 = vand.u32 %v633, 4294901760
        %v778 = vsub.f32 %v633, %v777
        %v779 = vand.u32 %v778, 4294901760
        %780 = vmatpush.msra.mxu0 %v779
        %v781 = vand.u32 %v632, 4294901760
        %v782 = vsub.f32 %v632, %v781
        %v783 = vand.u32 %v782, 4294901760
        %784 = vmatpush.msra.mxu0 %v783
        %v785 = vand.u32 %v631, 4294901760
        %v786 = vsub.f32 %v631, %v785
        %v787 = vand.u32 %v786, 4294901760
        %788 = vmatpush.msra.mxu0 %v787
        %v789 = vand.u32 %v630, 4294901760
        %v790 = vsub.f32 %v630, %v789
        %v791 = vand.u32 %v790, 4294901760
        %792 = vmatpush.msra.mxu0 %v791
        %v793 = vand.u32 %v636, 4294901760
        %794 = vmatmul.f32.gmra.mxu0 %v793
        %v795 = vpop.f32.mrf.mxu0
        %v796 = vadd.f32 %v763, %v795
        %797 = vdwg.mxu0
        %798 = vmatpush.msra.mxu0 0.0
        %799 = vmatpush.msra.mxu0 0.0
        %800 = vmatpush.msra.mxu0 0.0
        %801 = vmatpush.msra.mxu0 0.0
        %802 = vmatpush.msra.mxu0 0.0
        %803 = vmatpush.msra.mxu0 0.0
        %804 = vmatpush.msra.mxu0 0.0
        %805 = vmatpush.msra.mxu0 0.0
        %806 = vmatpush.msra.mxu0 0.0
        %807 = vmatpush.msra.mxu0 0.0
        %808 = vmatpush.msra.mxu0 0.0
        %809 = vmatpush.msra.mxu0 0.0
        %v810 = vand.u32 %v633, 4294901760
        %811 = vmatpush.msra.mxu0 %v810
        %v812 = vand.u32 %v632, 4294901760
        %813 = vmatpush.msra.mxu0 %v812
        %v814 = vand.u32 %v631, 4294901760
        %815 = vmatpush.msra.mxu0 %v814
        %v816 = vand.u32 %v630, 4294901760
        %817 = vmatpush.msra.mxu0 %v816
        %v818 = vand.u32 %v636, 4294901760
        %819 = vmatmul.f32.gmra.mxu0 %v818
        %v820 = vpop.f32.mrf.mxu0
        %v821 = vadd.f32 %v796, %v820
        %822 = vdwg.mxu0
        %v823 = vld [vmem:[%s326] sm:$0xff]
        %v824 = vld [vmem:[%s326 + $0x8] sm:$0xff]
        %v825 = vld [vmem:[%s326 + $0x10] sm:$0xff]
        %v826 = vld [vmem:[%s326 + $0x18] sm:$0xff]
        %827 = vmatpush.msra.mxu0 0.0
        %828 = vmatpush.msra.mxu0 0.0
        %829 = vmatpush.msra.mxu0 0.0
        %830 = vmatpush.msra.mxu0 0.0
        %831 = vmatpush.msra.mxu0 0.0
        %832 = vmatpush.msra.mxu0 0.0
        %833 = vmatpush.msra.mxu0 0.0
        %834 = vmatpush.msra.mxu0 0.0
        %835 = vmatpush.msra.mxu0 0.0
        %836 = vmatpush.msra.mxu0 0.0
        %837 = vmatpush.msra.mxu0 0.0
        %838 = vmatpush.msra.mxu0 0.0
        %v839 = vand.u32 %v826, 4294901760
        %840 = vmatpush.msra.mxu0 %v839
        %v841 = vand.u32 %v825, 4294901760
        %842 = vmatpush.msra.mxu0 %v841
        %v843 = vand.u32 %v824, 4294901760
        %844 = vmatpush.msra.mxu0 %v843
        %v845 = vand.u32 %v823, 4294901760
        %846 = vmatpush.msra.mxu0 %v845
        %v847 = vand.u32 %v636, 4294901760
        %v848 = vsub.f32 %v636, %v847
        %v849 = vand.u32 %v848, 4294901760
        %v850 = vsub.f32 %v848, %v849
        %v851 = vand.u32 %v850, 4294901760
        %852 = vmatmul.f32.gmra.mxu0 %v851
        %v853 = vpop.f32.mrf.mxu0
        %v854 = vadd.f32 0.0, %v853
        %855 = vdwg.mxu0
        %856 = vmatpush.msra.mxu0 0.0
        %857 = vmatpush.msra.mxu0 0.0
        %858 = vmatpush.msra.mxu0 0.0
        %859 = vmatpush.msra.mxu0 0.0
        %860 = vmatpush.msra.mxu0 0.0
        %861 = vmatpush.msra.mxu0 0.0
        %862 = vmatpush.msra.mxu0 0.0
        %863 = vmatpush.msra.mxu0 0.0
        %864 = vmatpush.msra.mxu0 0.0
        %865 = vmatpush.msra.mxu0 0.0
        %866 = vmatpush.msra.mxu0 0.0
        %867 = vmatpush.msra.mxu0 0.0
        %v868 = vand.u32 %v826, 4294901760
        %v869 = vsub.f32 %v826, %v868
        %v870 = vand.u32 %v869, 4294901760
        %v871 = vsub.f32 %v869, %v870
        %v872 = vand.u32 %v871, 4294901760
        %873 = vmatpush.msra.mxu0 %v872
        %v874 = vand.u32 %v825, 4294901760
        %v875 = vsub.f32 %v825, %v874
        %v876 = vand.u32 %v875, 4294901760
        %v877 = vsub.f32 %v875, %v876
        %v878 = vand.u32 %v877, 4294901760
        %879 = vmatpush.msra.mxu0 %v878
        %v880 = vand.u32 %v824, 4294901760
        %v881 = vsub.f32 %v824, %v880
        %v882 = vand.u32 %v881, 4294901760
        %v883 = vsub.f32 %v881, %v882
        %v884 = vand.u32 %v883, 4294901760
        %885 = vmatpush.msra.mxu0 %v884
        %v886 = vand.u32 %v823, 4294901760
        %v887 = vsub.f32 %v823, %v886
        %v888 = vand.u32 %v887, 4294901760
        %v889 = vsub.f32 %v887, %v888
        %v890 = vand.u32 %v889, 4294901760
        %891 = vmatpush.msra.mxu0 %v890
        %v892 = vand.u32 %v636, 4294901760
        %893 = vmatmul.f32.gmra.mxu0 %v892
        %v894 = vpop.f32.mrf.mxu0
        %v895 = vadd.f32 %v854, %v894
        %896 = vdwg.mxu0
        %897 = vmatpush.msra.mxu0 0.0
        %898 = vmatpush.msra.mxu0 0.0
        %899 = vmatpush.msra.mxu0 0.0
        %900 = vmatpush.msra.mxu0 0.0
        %901 = vmatpush.msra.mxu0 0.0
        %902 = vmatpush.msra.mxu0 0.0
        %903 = vmatpush.msra.mxu0 0.0
        %904 = vmatpush.msra.mxu0 0.0
        %905 = vmatpush.msra.mxu0 0.0
        %906 = vmatpush.msra.mxu0 0.0
        %907 = vmatpush.msra.mxu0 0.0
        %908 = vmatpush.msra.mxu0 0.0
        %v909 = vand.u32 %v826, 4294901760
        %v910 = vsub.f32 %v826, %v909
        %911 = vmatpush.msra.mxu0 %v910
        %v912 = vand.u32 %v825, 4294901760
        %v913 = vsub.f32 %v825, %v912
        %914 = vmatpush.msra.mxu0 %v913
        %v915 = vand.u32 %v824, 4294901760
        %v916 = vsub.f32 %v824, %v915
        %917 = vmatpush.msra.mxu0 %v916
        %v918 = vand.u32 %v823, 4294901760
        %v919 = vsub.f32 %v823, %v918
        %920 = vmatpush.msra.mxu0 %v919
        %v921 = vand.u32 %v636, 4294901760
        %v922 = vsub.f32 %v636, %v921
        %923 = vmatmul.f32.gmra.mxu0 %v922
        %v924 = vpop.f32.mrf.mxu0
        %v925 = vadd.f32 %v895, %v924
        %926 = vdwg.mxu0
        %927 = vmatpush.msra.mxu0 0.0
        %928 = vmatpush.msra.mxu0 0.0
        %929 = vmatpush.msra.mxu0 0.0
        %930 = vmatpush.msra.mxu0 0.0
        %931 = vmatpush.msra.mxu0 0.0
        %932 = vmatpush.msra.mxu0 0.0
        %933 = vmatpush.msra.mxu0 0.0
        %934 = vmatpush.msra.mxu0 0.0
        %935 = vmatpush.msra.mxu0 0.0
        %936 = vmatpush.msra.mxu0 0.0
        %937 = vmatpush.msra.mxu0 0.0
        %938 = vmatpush.msra.mxu0 0.0
        %v939 = vand.u32 %v826, 4294901760
        %940 = vmatpush.msra.mxu0 %v939
        %v941 = vand.u32 %v825, 4294901760
        %942 = vmatpush.msra.mxu0 %v941
        %v943 = vand.u32 %v824, 4294901760
        %944 = vmatpush.msra.mxu0 %v943
        %v945 = vand.u32 %v823, 4294901760
        %946 = vmatpush.msra.mxu0 %v945
        %v947 = vand.u32 %v636, 4294901760
        %v948 = vsub.f32 %v636, %v947
        %v949 = vand.u32 %v948, 4294901760
        %950 = vmatmul.f32.gmra.mxu0 %v949
        %v951 = vpop.f32.mrf.mxu0
        %v952 = vadd.f32 %v925, %v951
        %953 = vdwg.mxu0
        %954 = vmatpush.msra.mxu0 0.0
        %955 = vmatpush.msra.mxu0 0.0
        %956 = vmatpush.msra.mxu0 0.0
        %957 = vmatpush.msra.mxu0 0.0
        %958 = vmatpush.msra.mxu0 0.0
        %959 = vmatpush.msra.mxu0 0.0
        %960 = vmatpush.msra.mxu0 0.0
        %961 = vmatpush.msra.mxu0 0.0
        %962 = vmatpush.msra.mxu0 0.0
        %963 = vmatpush.msra.mxu0 0.0
        %964 = vmatpush.msra.mxu0 0.0
        %965 = vmatpush.msra.mxu0 0.0
        %v966 = vand.u32 %v826, 4294901760
        %v967 = vsub.f32 %v826, %v966
        %v968 = vand.u32 %v967, 4294901760
        %969 = vmatpush.msra.mxu0 %v968
        %v970 = vand.u32 %v825, 4294901760
        %v971 = vsub.f32 %v825, %v970
        %v972 = vand.u32 %v971, 4294901760
        %973 = vmatpush.msra.mxu0 %v972
        %v974 = vand.u32 %v824, 4294901760
        %v975 = vsub.f32 %v824, %v974
        %v976 = vand.u32 %v975, 4294901760
        %977 = vmatpush.msra.mxu0 %v976
        %v978 = vand.u32 %v823, 4294901760
        %v979 = vsub.f32 %v823, %v978
        %v980 = vand.u32 %v979, 4294901760
        %981 = vmatpush.msra.mxu0 %v980
        %v982 = vand.u32 %v636, 4294901760
        %983 = vmatmul.f32.gmra.mxu0 %v982
        %v984 = vpop.f32.mrf.mxu0
        %v985 = vadd.f32 %v952, %v984
        %986 = vdwg.mxu0
        %987 = vmatpush.msra.mxu0 0.0
        %988 = vmatpush.msra.mxu0 0.0
        %989 = vmatpush.msra.mxu0 0.0
        %990 = vmatpush.msra.mxu0 0.0
        %991 = vmatpush.msra.mxu0 0.0
        %992 = vmatpush.msra.mxu0 0.0
        %993 = vmatpush.msra.mxu0 0.0
        %994 = vmatpush.msra.mxu0 0.0
        %995 = vmatpush.msra.mxu0 0.0
        %996 = vmatpush.msra.mxu0 0.0
        %997 = vmatpush.msra.mxu0 0.0
        %998 = vmatpush.msra.mxu0 0.0
        %v999 = vand.u32 %v826, 4294901760
        %1000 = vmatpush.msra.mxu0 %v999
        %v1001 = vand.u32 %v825, 4294901760
        %1002 = vmatpush.msra.mxu0 %v1001
        %v1003 = vand.u32 %v824, 4294901760
        %1004 = vmatpush.msra.mxu0 %v1003
        %v1005 = vand.u32 %v823, 4294901760
        %1006 = vmatpush.msra.mxu0 %v1005
        %v1007 = vand.u32 %v636, 4294901760
        %1008 = vmatmul.f32.gmra.mxu0 %v1007
        %v1009 = vpop.f32.mrf.mxu0
        %v1010 = vadd.f32 %v985, %v1009
        %1011 = vdwg.mxu0
        %v1012 = vmul.f32 %v821, %v821
        %v1013 = vmul.f32 %v821, %v1012
        %v1014 = vmul.f32 %v1013, 0.044715
        %v1015 = vadd.f32 %v821, %v1014
        %v1016 = vmul.f32 %v1015, 0.7978846
        %v1017 = vtanh.pop %v1016
        %v1018 = vadd.f32 %v1017, 1.0
        %v1019 = vmul.f32 %v1018, 0.5
        %v1020 = vmul.f32 %v821, %v1019
        %v1021 = vmul.f32 %v1010, %v1020
        %v1022 = vld [vmem:[%s335] sm:$0xff]
        %v1023 = vld [vmem:[%s335 + $0x8] sm:$0xff]
        %v1024 = vld [vmem:[%s335 + $0x10] sm:$0xff]
        %v1025 = vld [vmem:[%s335 + $0x18] sm:$0xff]
        %v1026 = vld [vmem:[%s335 + $0x20] sm:$0xff]
        %v1027 = vld [vmem:[%s335 + $0x28] sm:$0xff]
        %v1028 = vld [vmem:[%s335 + $0x30] sm:$0xff]
        %v1029 = vld [vmem:[%s335 + $0x38] sm:$0xff]
        %vm1030 = vcmask 523264
        %v1032 = vsel %vm1030, %v1021, 0
        %1034 = vmatpush.msra.mxu0 0.0
        %1035 = vmatpush.msra.mxu0 0.0
        %1036 = vmatpush.msra.mxu0 0.0
        %1037 = vmatpush.msra.mxu0 0.0
        %1038 = vmatpush.msra.mxu0 0.0
        %1039 = vmatpush.msra.mxu0 0.0
        %1040 = vmatpush.msra.mxu0 0.0
        %1041 = vmatpush.msra.mxu0 0.0
        %v1042 = vand.u32 %v1029, 4294901760
        %1043 = vmatpush.msra.mxu0 %v1042
        %v1044 = vand.u32 %v1028, 4294901760
        %1045 = vmatpush.msra.mxu0 %v1044
        %v1046 = vand.u32 %v1027, 4294901760
        %1047 = vmatpush.msra.mxu0 %v1046
        %v1048 = vand.u32 %v1026, 4294901760
        %1049 = vmatpush.msra.mxu0 %v1048
        %v1050 = vand.u32 %v1025, 4294901760
        %1051 = vmatpush.msra.mxu0 %v1050
        %v1052 = vand.u32 %v1024, 4294901760
        %1053 = vmatpush.msra.mxu0 %v1052
        %v1054 = vand.u32 %v1023, 4294901760
        %1055 = vmatpush.msra.mxu0 %v1054
        %v1056 = vand.u32 %v1022, 4294901760
        %1057 = vmatpush.msra.mxu0 %v1056
        %v1058 = vand.u32 %v1032, 4294901760
        %v1059 = vsub.f32 %v1032, %v1058
        %v1060 = vand.u32 %v1059, 4294901760
        %v1061 = vsub.f32 %v1059, %v1060
        %v1062 = vand.u32 %v1061, 4294901760
        %1063 = vmatmul.f32.gmra.mxu0 %v1062
        %v1064 = vpop.f32.mrf.mxu0
        %v1065 = vadd.f32 0.0, %v1064
        %1066 = vdwg.mxu0
        %1067 = vmatpush.msra.mxu0 0.0
        %1068 = vmatpush.msra.mxu0 0.0
        %1069 = vmatpush.msra.mxu0 0.0
        %1070 = vmatpush.msra.mxu0 0.0
        %1071 = vmatpush.msra.mxu0 0.0
        %1072 = vmatpush.msra.mxu0 0.0
        %1073 = vmatpush.msra.mxu0 0.0
        %1074 = vmatpush.msra.mxu0 0.0
        %v1075 = vand.u32 %v1029, 4294901760
        %v1076 = vsub.f32 %v1029, %v1075
        %v1077 = vand.u32 %v1076, 4294901760
        %v1078 = vsub.f32 %v1076, %v1077
        %v1079 = vand.u32 %v1078, 4294901760
        %1080 = vmatpush.msra.mxu0 %v1079
        %v1081 = vand.u32 %v1028, 4294901760
        %v1082 = vsub.f32 %v1028, %v1081
        %v1083 = vand.u32 %v1082, 4294901760
        %v1084 = vsub.f32 %v1082, %v1083
        %v1085 = vand.u32 %v1084, 4294901760
        %1086 = vmatpush.msra.mxu0 %v1085
        %v1087 = vand.u32 %v1027, 4294901760
        %v1088 = vsub.f32 %v1027, %v1087
        %v1089 = vand.u32 %v1088, 4294901760
        %v1090 = vsub.f32 %v1088, %v1089
        %v1091 = vand.u32 %v1090, 4294901760
        %1092 = vmatpush.msra.mxu0 %v1091
        %v1093 = vand.u32 %v1026, 4294901760
        %v1094 = vsub.f32 %v1026, %v1093
        %v1095 = vand.u32 %v1094, 4294901760
        %v1096 = vsub.f32 %v1094, %v1095
        %v1097 = vand.u32 %v1096, 4294901760
        %1098 = vmatpush.msra.mxu0 %v1097
        %v1099 = vand.u32 %v1025, 4294901760
        %v1100 = vsub.f32 %v1025, %v1099
        %v1101 = vand.u32 %v1100, 4294901760
        %v1102 = vsub.f32 %v1100, %v1101
        %v1103 = vand.u32 %v1102, 4294901760
        %1104 = vmatpush.msra.mxu0 %v1103
        %v1105 = vand.u32 %v1024, 4294901760
        %v1106 = vsub.f32 %v1024, %v1105
        %v1107 = vand.u32 %v1106, 4294901760
        %v1108 = vsub.f32 %v1106, %v1107
        %v1109 = vand.u32 %v1108, 4294901760
        %1110 = vmatpush.msra.mxu0 %v1109
        %v1111 = vand.u32 %v1023, 4294901760
        %v1112 = vsub.f32 %v1023, %v1111
        %v1113 = vand.u32 %v1112, 4294901760
        %v1114 = vsub.f32 %v1112, %v1113
        %v1115 = vand.u32 %v1114, 4294901760
        %1116 = vmatpush.msra.mxu0 %v1115
        %v1117 = vand.u32 %v1022, 4294901760
        %v1118 = vsub.f32 %v1022, %v1117
        %v1119 = vand.u32 %v1118, 4294901760
        %v1120 = vsub.f32 %v1118, %v1119
        %v1121 = vand.u32 %v1120, 4294901760
        %1122 = vmatpush.msra.mxu0 %v1121
        %v1123 = vand.u32 %v1032, 4294901760
        %1124 = vmatmul.f32.gmra.mxu0 %v1123
        %v1125 = vpop.f32.mrf.mxu0
        %v1126 = vadd.f32 %v1065, %v1125
        %1127 = vdwg.mxu0
        %1128 = vmatpush.msra.mxu0 0.0
        %1129 = vmatpush.msra.mxu0 0.0
        %1130 = vmatpush.msra.mxu0 0.0
        %1131 = vmatpush.msra.mxu0 0.0
        %1132 = vmatpush.msra.mxu0 0.0
        %1133 = vmatpush.msra.mxu0 0.0
        %1134 = vmatpush.msra.mxu0 0.0
        %1135 = vmatpush.msra.mxu0 0.0
        %v1136 = vand.u32 %v1029, 4294901760
        %v1137 = vsub.f32 %v1029, %v1136
        %1138 = vmatpush.msra.mxu0 %v1137
        %v1139 = vand.u32 %v1028, 4294901760
        %v1140 = vsub.f32 %v1028, %v1139
        %1141 = vmatpush.msra.mxu0 %v1140
        %v1142 = vand.u32 %v1027, 4294901760
        %v1143 = vsub.f32 %v1027, %v1142
        %1144 = vmatpush.msra.mxu0 %v1143
        %v1145 = vand.u32 %v1026, 4294901760
        %v1146 = vsub.f32 %v1026, %v1145
        %1147 = vmatpush.msra.mxu0 %v1146
        %v1148 = vand.u32 %v1025, 4294901760
        %v1149 = vsub.f32 %v1025, %v1148
        %1150 = vmatpush.msra.mxu0 %v1149
        %v1151 = vand.u32 %v1024, 4294901760
        %v1152 = vsub.f32 %v1024, %v1151
        %1153 = vmatpush.msra.mxu0 %v1152
        %v1154 = vand.u32 %v1023, 4294901760
        %v1155 = vsub.f32 %v1023, %v1154
        %1156 = vmatpush.msra.mxu0 %v1155
        %v1157 = vand.u32 %v1022, 4294901760
        %v1158 = vsub.f32 %v1022, %v1157
        %1159 = vmatpush.msra.mxu0 %v1158
        %v1160 = vand.u32 %v1032, 4294901760
        %v1161 = vsub.f32 %v1032, %v1160
        %1162 = vmatmul.f32.gmra.mxu0 %v1161
        %v1163 = vpop.f32.mrf.mxu0
        %v1164 = vadd.f32 %v1126, %v1163
        %1165 = vdwg.mxu0
        %1166 = vmatpush.msra.mxu0 0.0
        %1167 = vmatpush.msra.mxu0 0.0
        %1168 = vmatpush.msra.mxu0 0.0
        %1169 = vmatpush.msra.mxu0 0.0
        %1170 = vmatpush.msra.mxu0 0.0
        %1171 = vmatpush.msra.mxu0 0.0
        %1172 = vmatpush.msra.mxu0 0.0
        %1173 = vmatpush.msra.mxu0 0.0
        %v1174 = vand.u32 %v1029, 4294901760
        %1175 = vmatpush.msra.mxu0 %v1174
        %v1176 = vand.u32 %v1028, 4294901760
        %1177 = vmatpush.msra.mxu0 %v1176
        %v1178 = vand.u32 %v1027, 4294901760
        %1179 = vmatpush.msra.mxu0 %v1178
        %v1180 = vand.u32 %v1026, 4294901760
        %1181 = vmatpush.msra.mxu0 %v1180
        %v1182 = vand.u32 %v1025, 4294901760
        %1183 = vmatpush.msra.mxu0 %v1182
        %v1184 = vand.u32 %v1024, 4294901760
        %1185 = vmatpush.msra.mxu0 %v1184
        %v1186 = vand.u32 %v1023, 4294901760
        %1187 = vmatpush.msra.mxu0 %v1186
        %v1188 = vand.u32 %v1022, 4294901760
        %1189 = vmatpush.msra.mxu0 %v1188
        %v1190 = vand.u32 %v1032, 4294901760
        %v1191 = vsub.f32 %v1032, %v1190
        %v1192 = vand.u32 %v1191, 4294901760
        %1193 = vmatmul.f32.gmra.mxu0 %v1192
        %v1194 = vpop.f32.mrf.mxu0
        %v1195 = vadd.f32 %v1164, %v1194
        %1196 = vdwg.mxu0
        %1197 = vmatpush.msra.mxu0 0.0
        %1198 = vmatpush.msra.mxu0 0.0
        %1199 = vmatpush.msra.mxu0 0.0
        %1200 = vmatpush.msra.mxu0 0.0
        %1201 = vmatpush.msra.mxu0 0.0
        %1202 = vmatpush.msra.mxu0 0.0
        %1203 = vmatpush.msra.mxu0 0.0
        %1204 = vmatpush.msra.mxu0 0.0
        %v1205 = vand.u32 %v1029, 4294901760
        %v1206 = vsub.f32 %v1029, %v1205
        %v1207 = vand.u32 %v1206, 4294901760
        %1208 = vmatpush.msra.mxu0 %v1207
        %v1209 = vand.u32 %v1028, 4294901760
        %v1210 = vsub.f32 %v1028, %v1209
        %v1211 = vand.u32 %v1210, 4294901760
        %1212 = vmatpush.msra.mxu0 %v1211
        %v1213 = vand.u32 %v1027, 4294901760
        %v1214 = vsub.f32 %v1027, %v1213
        %v1215 = vand.u32 %v1214, 4294901760
        %1216 = vmatpush.msra.mxu0 %v1215
        %v1217 = vand.u32 %v1026, 4294901760
        %v1218 = vsub.f32 %v1026, %v1217
        %v1219 = vand.u32 %v1218, 4294901760
        %1220 = vmatpush.msra.mxu0 %v1219
        %v1221 = vand.u32 %v1025, 4294901760
        %v1222 = vsub.f32 %v1025, %v1221
        %v1223 = vand.u32 %v1222, 4294901760
        %1224 = vmatpush.msra.mxu0 %v1223
        %v1225 = vand.u32 %v1024, 4294901760
        %v1226 = vsub.f32 %v1024, %v1225
        %v1227 = vand.u32 %v1226, 4294901760
        %1228 = vmatpush.msra.mxu0 %v1227
        %v1229 = vand.u32 %v1023, 4294901760
        %v1230 = vsub.f32 %v1023, %v1229
        %v1231 = vand.u32 %v1230, 4294901760
        %1232 = vmatpush.msra.mxu0 %v1231
        %v1233 = vand.u32 %v1022, 4294901760
        %v1234 = vsub.f32 %v1022, %v1233
        %v1235 = vand.u32 %v1234, 4294901760
        %1236 = vmatpush.msra.mxu0 %v1235
        %v1237 = vand.u32 %v1032, 4294901760
        %1238 = vmatmul.f32.gmra.mxu0 %v1237
        %v1239 = vpop.f32.mrf.mxu0
        %v1240 = vadd.f32 %v1195, %v1239
        %1241 = vdwg.mxu0
        %1242 = vmatpush.msra.mxu0 0.0
        %1243 = vmatpush.msra.mxu0 0.0
        %1244 = vmatpush.msra.mxu0 0.0
        %1245 = vmatpush.msra.mxu0 0.0
        %1246 = vmatpush.msra.mxu0 0.0
        %1247 = vmatpush.msra.mxu0 0.0
        %1248 = vmatpush.msra.mxu0 0.0
        %1249 = vmatpush.msra.mxu0 0.0
        %v1250 = vand.u32 %v1029, 4294901760
        %1251 = vmatpush.msra.mxu0 %v1250
        %v1252 = vand.u32 %v1028, 4294901760
        %1253 = vmatpush.msra.mxu0 %v1252
        %v1254 = vand.u32 %v1027, 4294901760
        %1255 = vmatpush.msra.mxu0 %v1254
        %v1256 = vand.u32 %v1026, 4294901760
        %1257 = vmatpush.msra.mxu0 %v1256
        %v1258 = vand.u32 %v1025, 4294901760
        %1259 = vmatpush.msra.mxu0 %v1258
        %v1260 = vand.u32 %v1024, 4294901760
        %1261 = vmatpush.msra.mxu0 %v1260
        %v1262 = vand.u32 %v1023, 4294901760
        %1263 = vmatpush.msra.mxu0 %v1262
        %v1264 = vand.u32 %v1022, 4294901760
        %1265 = vmatpush.msra.mxu0 %v1264
        %v1266 = vand.u32 %v1032, 4294901760
        %1267 = vmatmul.f32.gmra.mxu0 %v1266
        %v1268 = vpop.f32.mrf.mxu0
        %v1269 = vadd.f32 %v1240, %v1268
        %1270 = vdwg.mxu0
        %v1271 = vlaneseq
        %v1272 = vand.u32 %v1271, 127
        %v1273 = vstv %s25
        %vm1274 = vcmp.eq.s32.totalorder %v1272, %v1273
        %v1275 = vld [vmem:[#allocation2] sm:$0xff]
        %v1276 = vsel %vm1274, %v1275, 0.0
        %vm1277 = vcmask 31744
        %v1278 = vsel %vm1277, %v1276, 0.0
        %1279 = vadd.xlane.f32.xlu0 %v1278
        %v1280 = vpop.xlane.xlu0 %1279
        %v1281 = vld [vmem:[#allocation3] sm:$0xff]
        %v1282 = vmul.f32 %v1269, %v1280
        %v1283 = vadd.f32 %v1281, %v1282
        %1284 = vst.msk [vmem:[#allocation3] sm:$0xff] %vm634, %v1283
        %p1285 = scmp.eq.s32.totalorder %s25, 3
        %p1286 = pnand %p1285, %p338
        %p1287 = pneg %p1286
        // Predicated region
        $region45: #{tpu_custom_call.1} parent=39 // pred_check
          _
        $region46: #{tpu_custom_call.1} parent=39 // pred_check_branch
          %1289 = sbr.rel (%p1286) target = $region48
        $region47: #{tpu_custom_call.1} parent=39 // pred_region
          %v1290 = vld [vmem:[#allocation3] sm:$0xff]
          %1291 = vst.msk [vmem:[%s306] sm:$0xff] %vm634, %v1290
        $region48: #{tpu_custom_call.1} parent=39 // pred_fallthru
          _
        %s1292 = sand.u32 %s177, 1
        %s1293 = scalar_lea.sflag [#allocation5], %s1292
        %s1294 = sand.u32 %s177, 1
        %s1295 = smul.addr %s1294, 8
        %s1296 = scalar_lea.vmem [#allocation4], %s1295
        // Predicated region
        $region49: #{tpu_custom_call.1} parent=39 // pred_check
          %p1297 = pneg %p187
        $region50: #{tpu_custom_call.1} parent=39 // pred_check_branch
          %1299 = sbr.rel (%p1297) target = $region52
        $region51: #{tpu_custom_call.1} parent=39 // pred_region
          %1301 = vsyncadd %s1293, 0
          %s1302 = smul.addr %s24, 8
          %s1303 = scalar_lea.hbm %s5, %s1302
          %s1305 = sshll.u32 %s1296, 4
          %s1306 = int_to_ptr.vmem [resolvable:$true] %s1305
          %s1307 = sshll.u32 %s1303, 4
          %s1308 = int_to_ptr.hbm [resolvable:$true] %s1307
          %1310 = dma.vmem_to_hbm [thread:$0]  %s1306, 128, %s1308, %s1293
        $region52: #{tpu_custom_call.1} parent=39 // pred_fallthru
          _
      $region40: #{tpu_custom_call.1} parent=5 // pred_fallthru
        _
      %p1311 = scmp.le.s32.totalorder 2, %s14
      // Predicated region
      $region53: #{tpu_custom_call.1} parent=5 // pred_check
        %p1312 = pneg %p1311
      $region54: #{tpu_custom_call.1} parent=5 // pred_check_branch
        %1314 = sbr.rel (%p1312) target = $region56
      $region55: #{tpu_custom_call.1} parent=5 // pred_region
        %s1315 = ssub.s32 %s14, 2
        // Predicated region
        $region57: #{tpu_custom_call.1} parent=55 // pred_check
          %p1316 = pneg %p193
        $region58: #{tpu_custom_call.1} parent=55 // pred_check_branch
          %1318 = sbr.rel (%p1316) target = $region60
        $region59: #{tpu_custom_call.1} parent=55 // pred_region
          %s1319 = sand.u32 %s178, 1
          %s1320 = scalar_lea.sflag [#allocation5], %s1319
          %s1321 = sand.u32 %s178, 1
          %s1322 = smul.addr %s1321, 8
          %s1323 = scalar_lea.vmem [#allocation4], %s1322
          %1325 = dma.done %s1320, 128
        $region60: #{tpu_custom_call.1} parent=55 // pred_fallthru
          _
      $region56: #{tpu_custom_call.1} parent=5 // pred_fallthru
        _
    $region6: #{tpu_custom_call.1} parent=1 // loop_footer
      %s18 = sadd.s32 1, %s14
    $region7: #{tpu_custom_call.1} parent=1 // loop_footer_branch
      %13 = sbr.rel target = $region3
    $region8: #{tpu_custom_call.1} parent=1 // loop_exit
      _
    %1326 = vsyncpa [#allocation5], 1
    %s1327 = scalar_lea.sflag [#allocation5], 1
    %1328 = vsyncpa %s1327, 1

</llo_original>
